<compile_context>
chip_gen: v5e
topology: v5e:2x2
jax: 0.10.0
libtpu: 0.0.40
codegen_flags: <defaults>
</compile_context>

<pallas_src>
import math

import jax
import jax.numpy as jnp
from jax import lax
from jax.experimental import pallas as pl
from jax.experimental.pallas import tpu as pltpu

# ---- small synthetic model hyper-parameters -------------------------------
B = 2             # batch
S = 8             # sequence length
BS = B * S        # fused batch*seq rows
H = 32            # hidden size
NH = 4            # attention heads
DH = H // NH      # head dim
F = 64            # FFN intermediate size
L = 2             # encoder layers
VOCAB = 128       # token vocabulary
NUM_LABELS = 6
LN_EPS = 1e-12

EMB_ROWS = ((VOCAB + S + 15) // 16) * 16   # word+pos rows, bf16-tile aligned (144)
CW = 128                                   # classifier weight lanes (padded, lane-dense)
VW = 128                                   # bias/LN slab lane width

# ---- bias / LayerNorm slab row layout (one f32 (VROWS, VW) array) ----------
R_LN_E_G, R_LN_E_B = 0, 1
_PER_LAYER = 8
O_BQKV, O_BO, O_LN1G, O_LN1B, O_B1, O_LN2G, O_LN2B, O_B2 = range(_PER_LAYER)


def _lbase(l):
    return 2 + l * _PER_LAYER


R_BC = 2 + L * _PER_LAYER
VROWS = ((R_BC + 1 + 7) // 8) * 8          # pad row count to a multiple of 8


# ---- in-kernel math helpers (traced inside the Pallas kernel) --------------
def _layernorm(x, g, b):
    mu = jnp.mean(x, axis=-1, keepdims=True)
    var = jnp.mean((x - mu) ** 2, axis=-1, keepdims=True)
    return (x - mu) * lax.rsqrt(var + LN_EPS) * g + b


def _gelu(x):
    # tanh approximation (EUP tanh); differs from PyTorch's exact erf GELU by <1e-3.
    c = math.sqrt(2.0 / math.pi)
    return 0.5 * x * (1.0 + jnp.tanh(c * (x + 0.044715 * x * x * x)))


def _softmax_last(x):
    m = jnp.max(x, axis=-1, keepdims=True)
    e = jnp.exp(x - m)
    s = jnp.sum(e, axis=-1, keepdims=True)
    return e * pl.reciprocal(s, approx=True)   # EUP approx reciprocal


# ---- the Pallas kernel ------------------------------------------------------
def encoder_cls_kernel(
    ids_ref,      # (BS, 2) int32: [token_id, VOCAB + position]
    mask_ref,     # (B, 1, S) float32 attention mask (1 keep / 0 pad)
    emb_ref,      # (EMB_ROWS, H) bf16: rows [0:VOCAB]=word emb, [VOCAB:VOCAB+S]=pos emb
    wattn_ref,    # (L, H, 4H) bf16: cols [0:3H]=Wqkv (q pre-scaled), [3H:4H]=Wo
    wffn_ref,     # (L, H+F, F) bf16: rows [0:H]=W1, rows [H:H+F] cols [0:H]=W2
    wcls_ref,     # (H, CW) bf16: cols [0:NUM_LABELS]=classifier weight, rest zero
    vecs_ref,     # (VROWS, VW) f32: all biases + LayerNorm params (see row layout)
    out_ref,      # (B, NUM_LABELS) f32
):
    f32, bf16 = jnp.float32, jnp.bfloat16
    vecs = vecs_ref[...]
    w_attn = wattn_ref[...]
    w_ffn = wffn_ref[...]

    def vrow(r, w):           # static (1, w) slice of the bias/LN slab
        return vecs[r:r + 1, 0:w]

    # ---- fused word+position embedding lookup: one two-hot @ table MXU dot ----
    ids = ids_ref[...]                                                   # (BS, 2)
    col = lax.broadcasted_iota(jnp.int32, (BS, EMB_ROWS), 1)
    twohot = ((col == ids[:, 0:1]) | (col == ids[:, 1:2])).astype(bf16)  # (BS, EMB_ROWS)
    x = jnp.dot(twohot, emb_ref[...], preferred_element_type=f32)        # (BS, H)
    x = _layernorm(x, vrow(R_LN_E_G, H), vrow(R_LN_E_B, H))

    # ---- additive key mask, built ONCE at the head-batched score shape --------
    neg = (1.0 - mask_ref[...]) * (-1e9)                                 # (B, 1, S)
    neg_bss = jnp.broadcast_to(neg, (B, S, S))
    add_mask = jnp.concatenate([neg_bss] * NH, axis=0)                   # (NH*B, S, S)

    def split_heads(t, off):  # (BS, 3H) f32 -> (NH*B, S, DH) f32, head-major
        return jnp.concatenate(
            [t[:, off + h * DH: off + (h + 1) * DH].reshape(B, S, DH)
             for h in range(NH)], axis=0)

    def merge_heads(c):       # (NH*B, S, DH) f32 -> (BS, H): concat heads along lanes
        return jnp.concatenate(
            [c[h * B:(h + 1) * B].reshape(BS, DH) for h in range(NH)], axis=1)

    for l in range(L):                          # static unroll (L = 2)
        b0 = _lbase(l)
        wl = w_attn[l]                                                   # (H, 4H) bf16

        # fused QKV projection (q columns/bias pre-scaled by 1/sqrt(DH) at packing)
        qkv = jnp.dot(x.astype(bf16), wl[:, 0:3 * H],
                      preferred_element_type=f32) + vrow(b0 + O_BQKV, 3 * H)  # (BS, 3H)
        qh = split_heads(qkv, 0)
        kh = split_heads(qkv, H)
        vh = split_heads(qkv, 2 * H)

        # all heads & batches in one 3-D dot / one softmax / one context dot
        s = lax.dot_general(qh.astype(bf16), kh.astype(bf16),
                            (((2,), (2,)), ((0,), (0,))),
                            preferred_element_type=f32)                  # (NH*B, S, S)
        p = _softmax_last(s + add_mask)
        c = lax.dot_general(p.astype(bf16), vh.astype(bf16),
                            (((2,), (1,)), ((0,), (0,))),
                            preferred_element_type=f32)                  # (NH*B, S, DH)

        # concat heads along lanes, single output projection
        attn = jnp.dot(merge_heads(c).astype(bf16), wl[:, 3 * H:4 * H],
                       preferred_element_type=f32) + vrow(b0 + O_BO, H)
        x = _layernorm(x + attn, vrow(b0 + O_LN1G, H), vrow(b0 + O_LN1B, H))

        # FFN
        wf = w_ffn[l]                                                    # (H+F, F) bf16
        hdn = _gelu(jnp.dot(x.astype(bf16), wf[0:H, :],
                            preferred_element_type=f32) + vrow(b0 + O_B1, F))
        ffn = jnp.dot(hdn.astype(bf16), wf[H:H + F, 0:H],
                      preferred_element_type=f32) + vrow(b0 + O_B2, H)
        x = _layernorm(x + ffn, vrow(b0 + O_LN2G, H), vrow(b0 + O_LN2B, H))

    # ---- classifier on all rows (same single MXU push), then select CLS rows ---
    logits_all = jnp.dot(x.astype(bf16), wcls_ref[...],
                         preferred_element_type=f32)                     # (BS, CW)
    cls = jnp.concatenate([logits_all[b * S:b * S + 1, :] for b in range(B)],
                          axis=0)                                        # (B, CW)
    logits = cls[:, 0:NUM_LABELS] + vrow(R_BC, NUM_LABELS)
    out_ref[...] = jax.nn.sigmoid(logits)       # single full store


# ---- wrapper ----------------------------------------------------------------
def multilabel_transformer_forward(input_ids, attention_mask, params):
    # Note: token ids are assumed in-range [0, VOCAB); out-of-range ids would
    # silently produce a zero word embedding via the one-hot compare.
    tok = input_ids.astype(jnp.int32).reshape(BS, 1)
    pos = (jnp.tile(jnp.arange(S, dtype=jnp.int32), (B,)) + VOCAB).reshape(BS, 1)
    ids2 = jnp.concatenate([tok, pos], axis=1)                           # (BS, 2)
    mask = attention_mask.astype(jnp.float32).reshape(B, 1, S)

    kernel_inputs = (
        ids2, mask,
        params["emb_tab"], params["w_attn"], params["w_ffn"],
        params["w_cls"], params["vecs"],
    )
    # Single invocation, no grid: everything fits VMEM; on v5e/v6e (one TC) a
    # grid would only add per-step overhead.  (On v7x a batch grid with
    # parallel semantics could split rows across its two TensorCores if B grows.)
    return pl.pallas_call(
        encoder_cls_kernel,
        out_shape=jax.ShapeDtypeStruct((B, NUM_LABELS), jnp.float32),
        in_specs=[pl.BlockSpec(memory_space=pltpu.MemorySpace.VMEM)
                  for _ in kernel_inputs],
        out_specs=pl.BlockSpec(memory_space=pltpu.MemorySpace.VMEM),
    )(*kernel_inputs)


# ---- parameter packing into kernel slabs ------------------------------------
def pack_params(raw):
    bf16 = jnp.bfloat16
    scale = 1.0 / math.sqrt(DH)

    # embedding table: word rows, position rows, zero padding rows
    emb_tab = jnp.zeros((EMB_ROWS, H), jnp.float32)
    emb_tab = emb_tab.at[:VOCAB].set(raw["word_emb"])
    emb_tab = emb_tab.at[VOCAB:VOCAB + S].set(raw["pos_emb"])

    # attention weights: [Wq*scale | Wk | Wv | Wo]  -> (L, H, 4H)
    w_attn = jnp.concatenate(
        [raw["wq"] * scale, raw["wk"], raw["wv"], raw["wo"]], axis=2)

    # FFN weights: rows [0:H]=W1 (H,F); rows [H:H+F] cols [0:H]=W2 (F,H)
    w2p = jnp.pad(raw["w2"], ((0, 0), (0, 0), (0, F - H)))
    w_ffn = jnp.concatenate([raw["w1"], w2p], axis=1)                    # (L, H+F, F)

    # classifier weight padded lane-dense
    w_cls = jnp.pad(raw["wc"], ((0, 0), (0, CW - NUM_LABELS)))           # (H, CW)

    # all biases + LayerNorm params in one f32 slab
    vecs = jnp.zeros((VROWS, VW), jnp.float32)
    vecs = vecs.at[R_LN_E_G, :H].set(raw["ln_e_g"][0])
    vecs = vecs.at[R_LN_E_B, :H].set(raw["ln_e_b"][0])
    for l in range(L):
        b0 = _lbase(l)
        bqkv = jnp.concatenate(
            [raw["bq"][l, 0] * scale, raw["bk"][l, 0], raw["bv"][l, 0]])
        vecs = vecs.at[b0 + O_BQKV, :3 * H].set(bqkv)
        vecs = vecs.at[b0 + O_BO, :H].set(raw["bo"][l, 0])
        vecs = vecs.at[b0 + O_LN1G, :H].set(raw["ln1_g"][l, 0])
        vecs = vecs.at[b0 + O_LN1B, :H].set(raw["ln1_b"][l, 0])
        vecs = vecs.at[b0 + O_B1, :F].set(raw["b1"][l, 0])
        vecs = vecs.at[b0 + O_LN2G, :H].set(raw["ln2_g"][l, 0])
        vecs = vecs.at[b0 + O_LN2B, :H].set(raw["ln2_b"][l, 0])
        vecs = vecs.at[b0 + O_B2, :H].set(raw["b2"][l, 0])
    vecs = vecs.at[R_BC, :NUM_LABELS].set(raw["bc"][0])

    return {
        "emb_tab": emb_tab.astype(bf16),
        "w_attn": w_attn.astype(bf16),
        "w_ffn": w_ffn.astype(bf16),
        "w_cls": w_cls.astype(bf16),
        "vecs": vecs,
    }


# ---- deterministic parameter initialization ---------------------------------
def init_params(key):
    ks = iter(jax.random.split(key, 32))
    n = lambda shape, std=0.02: (std * jax.random.normal(next(ks), shape)
                                 ).astype(jnp.float32)
    z = lambda shape: jnp.zeros(shape, jnp.float32)
    o = lambda shape: jnp.ones(shape, jnp.float32)
    raw = {
        "word_emb": n((VOCAB, H)),
        "pos_emb":  n((S, H)),
        "ln_e_g": o((1, H)), "ln_e_b": z((1, H)),
        "wq": n((L, H, H)), "bq": z((L, 1, H)),
        "wk": n((L, H, H)), "bk": z((L, 1, H)),
        "wv": n((L, H, H)), "bv": z((L, 1, H)),
        "wo": n((L, H, H)), "bo": z((L, 1, H)),
        "ln1_g": o((L, 1, H)), "ln1_b": z((L, 1, H)),
        "w1": n((L, H, F)), "b1": z((L, 1, F)),
        "w2": n((L, F, H)), "b2": z((L, 1, H)),
        "ln2_g": o((L, 1, H)), "ln2_b": z((L, 1, H)),
        # classifier: nn.init.normal_(std=0.02), zero bias (as in the module)
        "wc": n((H, NUM_LABELS)), "bc": z((1, NUM_LABELS)),
    }
    return pack_params(raw)


if __name__ == "__main__":
    key = jax.random.PRNGKey(0)
    pkey, ikey = jax.random.split(key)
    params = init_params(pkey)

    input_ids = jax.random.randint(ikey, (B, S), 0, VOCAB, dtype=jnp.int32)
    # mark the last two tokens of every row as padding to exercise the mask
    attention_mask = jnp.ones((B, S), dtype=jnp.int32).at[:, S - 2:].set(0)

    forward = jax.jit(multilabel_transformer_forward)
    probs = jax.block_until_ready(forward(input_ids, attention_mask, params))

    assert probs.shape == (B, NUM_LABELS)
    assert bool(jnp.all((probs >= 0.0) & (probs <= 1.0)))
    print("KERNEL_OK")
</pallas_src>

<mosaic_0001>
module attributes {stable_mosaic.version = 11 : i64} {
  func.func @encoder_cls_kernel(%arg0: memref<16x2xi32, #tpu.memory_space<vmem>>, %arg1: memref<2x1x8xf32, #tpu.memory_space<vmem>>, %arg2: memref<144x32xbf16, #tpu.memory_space<vmem>>, %arg3: memref<2x32x128xbf16, #tpu.memory_space<vmem>>, %arg4: memref<2x96x64xbf16, #tpu.memory_space<vmem>>, %arg5: memref<32x128xbf16, #tpu.memory_space<vmem>>, %arg6: memref<24x128xf32, #tpu.memory_space<vmem>>, %arg7: memref<2x6xf32, #tpu.memory_space<vmem>>) attributes {dimension_semantics = [], scalar_prefetch = 0 : i64, scratch_operands = 0 : i64, tpu.core_type = #tpu.core_type<tc>} {
    %c0 = arith.constant 0 : index
    %c0_0 = arith.constant 0 : index
    %0 = vector.load %arg6[%c0, %c0_0] : memref<24x128xf32, #tpu.memory_space<vmem>>, vector<24x128xf32>
    %c0_1 = arith.constant 0 : index
    %c0_2 = arith.constant 0 : index
    %c0_3 = arith.constant 0 : index
    %1 = vector.load %arg3[%c0_1, %c0_2, %c0_3] : memref<2x32x128xbf16, #tpu.memory_space<vmem>>, vector<2x32x128xbf16>
    %c0_4 = arith.constant 0 : index
    %c0_5 = arith.constant 0 : index
    %c0_6 = arith.constant 0 : index
    %2 = vector.load %arg4[%c0_4, %c0_5, %c0_6] : memref<2x96x64xbf16, #tpu.memory_space<vmem>>, vector<2x96x64xbf16>
    %c0_7 = arith.constant 0 : index
    %c0_8 = arith.constant 0 : index
    %3 = vector.load %arg0[%c0_7, %c0_8] : memref<16x2xi32, #tpu.memory_space<vmem>>, vector<16x2xi32>
    %4 = tpu.iota {dimensions = array<i32: 1>} : vector<16x144xi32>
    %5 = vector.extract_strided_slice %3 {offsets = [0, 0], sizes = [16, 1], strides = [1, 1]} : vector<16x2xi32> to vector<16x1xi32>
    %6 = vector.broadcast %5 : vector<16x1xi32> to vector<16x144xi32>
    %7 = arith.cmpi eq, %4, %6 : vector<16x144xi32>
    %8 = vector.extract_strided_slice %3 {offsets = [0, 1], sizes = [16, 1], strides = [1, 1]} : vector<16x2xi32> to vector<16x1xi32>
    %9 = vector.broadcast %8 : vector<16x1xi32> to vector<16x144xi32>
    %10 = arith.cmpi eq, %4, %9 : vector<16x144xi32>
    %11 = arith.ori %7, %10 : vector<16x144xi1>
    %12 = arith.extui %11 : vector<16x144xi1> to vector<16x144xi32>
    %13 = arith.sitofp %12 : vector<16x144xi32> to vector<16x144xf32>
    %14 = arith.truncf %13 : vector<16x144xf32> to vector<16x144xbf16>
    %c0_9 = arith.constant 0 : index
    %c0_10 = arith.constant 0 : index
    %15 = vector.load %arg2[%c0_9, %c0_10] : memref<144x32xbf16, #tpu.memory_space<vmem>>, vector<144x32xbf16>
    %cst = arith.constant dense<0.000000e+00> : vector<16x32xf32>
    %16 = tpu.matmul %14, %15, %cst {dimension_numbers = #tpu.dot_dimension_numbers<[1], [0], [0], [1], [0, 0, 1, 1], [], []>} : vector<16x144xbf16>, vector<144x32xbf16>, vector<16x32xf32> -> vector<16x32xf32>
    %17 = vector.extract_strided_slice %0 {offsets = [0, 0], sizes = [1, 32], strides = [1, 1]} : vector<24x128xf32> to vector<1x32xf32>
    %18 = vector.extract_strided_slice %0 {offsets = [1, 0], sizes = [1, 32], strides = [1, 1]} : vector<24x128xf32> to vector<1x32xf32>
    %cst_11 = arith.constant dense<0.000000e+00> : vector<16xf32>
    %19 = vector.multi_reduction <add>, %16, %cst_11 [1] : vector<16x32xf32> to vector<16xf32>
    %20 = vector.shape_cast %19 : vector<16xf32> to vector<16x1xf32>
    %cst_12 = arith.constant 3.200000e+01 : f32
    %21 = vector.broadcast %cst_12 : f32 to vector<16x1xf32>
    %22 = arith.divf %20, %21 : vector<16x1xf32>
    %23 = vector.broadcast %22 : vector<16x1xf32> to vector<16x32xf32>
    %24 = arith.subf %16, %23 : vector<16x32xf32>
    %25 = arith.mulf %24, %24 : vector<16x32xf32>
    %cst_13 = arith.constant dense<0.000000e+00> : vector<16xf32>
    %26 = vector.multi_reduction <add>, %25, %cst_13 [1] : vector<16x32xf32> to vector<16xf32>
    %27 = vector.shape_cast %26 : vector<16xf32> to vector<16x1xf32>
    %cst_14 = arith.constant 3.200000e+01 : f32
    %28 = vector.broadcast %cst_14 : f32 to vector<16x1xf32>
    %29 = arith.divf %27, %28 : vector<16x1xf32>
    %30 = vector.broadcast %22 : vector<16x1xf32> to vector<16x32xf32>
    %31 = arith.subf %16, %30 : vector<16x32xf32>
    %cst_15 = arith.constant 9.99999996E-13 : f32
    %32 = vector.broadcast %cst_15 : f32 to vector<16x1xf32>
    %33 = arith.addf %29, %32 : vector<16x1xf32>
    %34 = math.rsqrt %33 : vector<16x1xf32>
    %35 = vector.broadcast %34 : vector<16x1xf32> to vector<16x32xf32>
    %36 = arith.mulf %31, %35 : vector<16x32xf32>
    %37 = vector.broadcast %17 : vector<1x32xf32> to vector<16x32xf32>
    %38 = arith.mulf %36, %37 : vector<16x32xf32>
    %39 = vector.broadcast %18 : vector<1x32xf32> to vector<16x32xf32>
    %40 = arith.addf %38, %39 : vector<16x32xf32>
    %c0_16 = arith.constant 0 : index
    %c0_17 = arith.constant 0 : index
    %c0_18 = arith.constant 0 : index
    %41 = vector.load %arg1[%c0_16, %c0_17, %c0_18] : memref<2x1x8xf32, #tpu.memory_space<vmem>>, vector<2x1x8xf32>
    %cst_19 = arith.constant 1.000000e+00 : f32
    %42 = vector.broadcast %cst_19 : f32 to vector<2x1x8xf32>
    %43 = arith.subf %42, %41 : vector<2x1x8xf32>
    %cst_20 = arith.constant -1.000000e+09 : f32
    %44 = vector.broadcast %cst_20 : f32 to vector<2x1x8xf32>
    %45 = arith.mulf %43, %44 : vector<2x1x8xf32>
    %46 = vector.shape_cast %45 : vector<2x1x8xf32> to vector<2x1x8xf32>
    %47 = vector.broadcast %46 : vector<2x1x8xf32> to vector<2x8x8xf32>
    %48 = tpu.concatenate %47, %47, %47, %47 in 0 : vector<2x8x8xf32>, vector<2x8x8xf32>, vector<2x8x8xf32>, vector<2x8x8xf32> -> vector<8x8x8xf32>
    %49 = vector.extract_strided_slice %1 {offsets = [0, 0, 0], sizes = [1, 32, 128], strides = [1, 1, 1]} : vector<2x32x128xbf16> to vector<1x32x128xbf16>
    %50 = vector.shape_cast %49 : vector<1x32x128xbf16> to vector<32x128xbf16>
    %51 = arith.truncf %40 : vector<16x32xf32> to vector<16x32xbf16>
    %52 = vector.extract_strided_slice %50 {offsets = [0, 0], sizes = [32, 96], strides = [1, 1]} : vector<32x128xbf16> to vector<32x96xbf16>
    %cst_21 = arith.constant dense<0.000000e+00> : vector<16x96xf32>
    %53 = tpu.matmul %51, %52, %cst_21 {dimension_numbers = #tpu.dot_dimension_numbers<[1], [0], [0], [1], [0, 0, 1, 1], [], []>} : vector<16x32xbf16>, vector<32x96xbf16>, vector<16x96xf32> -> vector<16x96xf32>
    %54 = vector.extract_strided_slice %0 {offsets = [2, 0], sizes = [1, 96], strides = [1, 1]} : vector<24x128xf32> to vector<1x96xf32>
    %55 = vector.broadcast %54 : vector<1x96xf32> to vector<16x96xf32>
    %56 = arith.addf %53, %55 : vector<16x96xf32>
    %57 = vector.extract_strided_slice %56 {offsets = [0, 0], sizes = [16, 8], strides = [1, 1]} : vector<16x96xf32> to vector<16x8xf32>
    %58 = vector.shape_cast %57 : vector<16x8xf32> to vector<2x8x8xf32>
    %59 = vector.extract_strided_slice %56 {offsets = [0, 8], sizes = [16, 8], strides = [1, 1]} : vector<16x96xf32> to vector<16x8xf32>
    %60 = vector.shape_cast %59 : vector<16x8xf32> to vector<2x8x8xf32>
    %61 = vector.extract_strided_slice %56 {offsets = [0, 16], sizes = [16, 8], strides = [1, 1]} : vector<16x96xf32> to vector<16x8xf32>
    %62 = vector.shape_cast %61 : vector<16x8xf32> to vector<2x8x8xf32>
    %63 = vector.extract_strided_slice %56 {offsets = [0, 24], sizes = [16, 8], strides = [1, 1]} : vector<16x96xf32> to vector<16x8xf32>
    %64 = vector.shape_cast %63 : vector<16x8xf32> to vector<2x8x8xf32>
    %65 = tpu.concatenate %58, %60, %62, %64 in 0 : vector<2x8x8xf32>, vector<2x8x8xf32>, vector<2x8x8xf32>, vector<2x8x8xf32> -> vector<8x8x8xf32>
    %66 = vector.extract_strided_slice %56 {offsets = [0, 32], sizes = [16, 8], strides = [1, 1]} : vector<16x96xf32> to vector<16x8xf32>
    %67 = vector.shape_cast %66 : vector<16x8xf32> to vector<2x8x8xf32>
    %68 = vector.extract_strided_slice %56 {offsets = [0, 40], sizes = [16, 8], strides = [1, 1]} : vector<16x96xf32> to vector<16x8xf32>
    %69 = vector.shape_cast %68 : vector<16x8xf32> to vector<2x8x8xf32>
    %70 = vector.extract_strided_slice %56 {offsets = [0, 48], sizes = [16, 8], strides = [1, 1]} : vector<16x96xf32> to vector<16x8xf32>
    %71 = vector.shape_cast %70 : vector<16x8xf32> to vector<2x8x8xf32>
    %72 = vector.extract_strided_slice %56 {offsets = [0, 56], sizes = [16, 8], strides = [1, 1]} : vector<16x96xf32> to vector<16x8xf32>
    %73 = vector.shape_cast %72 : vector<16x8xf32> to vector<2x8x8xf32>
    %74 = tpu.concatenate %67, %69, %71, %73 in 0 : vector<2x8x8xf32>, vector<2x8x8xf32>, vector<2x8x8xf32>, vector<2x8x8xf32> -> vector<8x8x8xf32>
    %75 = vector.extract_strided_slice %56 {offsets = [0, 64], sizes = [16, 8], strides = [1, 1]} : vector<16x96xf32> to vector<16x8xf32>
    %76 = vector.shape_cast %75 : vector<16x8xf32> to vector<2x8x8xf32>
    %77 = vector.extract_strided_slice %56 {offsets = [0, 72], sizes = [16, 8], strides = [1, 1]} : vector<16x96xf32> to vector<16x8xf32>
    %78 = vector.shape_cast %77 : vector<16x8xf32> to vector<2x8x8xf32>
    %79 = vector.extract_strided_slice %56 {offsets = [0, 80], sizes = [16, 8], strides = [1, 1]} : vector<16x96xf32> to vector<16x8xf32>
    %80 = vector.shape_cast %79 : vector<16x8xf32> to vector<2x8x8xf32>
    %81 = vector.extract_strided_slice %56 {offsets = [0, 88], sizes = [16, 8], strides = [1, 1]} : vector<16x96xf32> to vector<16x8xf32>
    %82 = vector.shape_cast %81 : vector<16x8xf32> to vector<2x8x8xf32>
    %83 = tpu.concatenate %76, %78, %80, %82 in 0 : vector<2x8x8xf32>, vector<2x8x8xf32>, vector<2x8x8xf32>, vector<2x8x8xf32> -> vector<8x8x8xf32>
    %84 = arith.truncf %65 : vector<8x8x8xf32> to vector<8x8x8xbf16>
    %85 = arith.truncf %74 : vector<8x8x8xf32> to vector<8x8x8xbf16>
    %cst_22 = arith.constant dense<0.000000e+00> : vector<8x8x8xf32>
    %86 = tpu.matmul %84, %85, %cst_22 {dimension_numbers = #tpu.dot_dimension_numbers<[2], [2], [1], [1], [0, 0, 0, 1, 1, 1], [0], [0]>} : vector<8x8x8xbf16>, vector<8x8x8xbf16>, vector<8x8x8xf32> -> vector<8x8x8xf32>
    %87 = arith.addf %86, %48 : vector<8x8x8xf32>
    %cst_23 = arith.constant dense<0xFF800000> : vector<8x8xf32>
    %88 = vector.multi_reduction <maximumf>, %87, %cst_23 [2] : vector<8x8x8xf32> to vector<8x8xf32>
    %89 = vector.shape_cast %88 : vector<8x8xf32> to vector<8x8x1xf32>
    %90 = vector.broadcast %89 : vector<8x8x1xf32> to vector<8x8x8xf32>
    %91 = arith.subf %87, %90 : vector<8x8x8xf32>
    %92 = math.exp %91 : vector<8x8x8xf32>
    %cst_24 = arith.constant dense<0.000000e+00> : vector<8x8xf32>
    %93 = vector.multi_reduction <add>, %92, %cst_24 [2] : vector<8x8x8xf32> to vector<8x8xf32>
    %94 = vector.shape_cast %93 : vector<8x8xf32> to vector<8x8x1xf32>
    %95 = tpu.reciprocal %94 {approx = true} : vector<8x8x1xf32> -> vector<8x8x1xf32>
    %96 = vector.broadcast %95 : vector<8x8x1xf32> to vector<8x8x8xf32>
    %97 = arith.mulf %92, %96 : vector<8x8x8xf32>
    %98 = arith.truncf %97 : vector<8x8x8xf32> to vector<8x8x8xbf16>
    %99 = arith.truncf %83 : vector<8x8x8xf32> to vector<8x8x8xbf16>
    %cst_25 = arith.constant dense<0.000000e+00> : vector<8x8x8xf32>
    %100 = tpu.matmul %98, %99, %cst_25 {dimension_numbers = #tpu.dot_dimension_numbers<[2], [1], [1], [2], [0, 0, 0, 1, 1, 2], [0], [0]>} : vector<8x8x8xbf16>, vector<8x8x8xbf16>, vector<8x8x8xf32> -> vector<8x8x8xf32>
    %101 = vector.extract_strided_slice %100 {offsets = [0, 0, 0], sizes = [2, 8, 8], strides = [1, 1, 1]} : vector<8x8x8xf32> to vector<2x8x8xf32>
    %102 = vector.shape_cast %101 : vector<2x8x8xf32> to vector<16x8xf32>
    %103 = vector.extract_strided_slice %100 {offsets = [2, 0, 0], sizes = [2, 8, 8], strides = [1, 1, 1]} : vector<8x8x8xf32> to vector<2x8x8xf32>
    %104 = vector.shape_cast %103 : vector<2x8x8xf32> to vector<16x8xf32>
    %105 = vector.extract_strided_slice %100 {offsets = [4, 0, 0], sizes = [2, 8, 8], strides = [1, 1, 1]} : vector<8x8x8xf32> to vector<2x8x8xf32>
    %106 = vector.shape_cast %105 : vector<2x8x8xf32> to vector<16x8xf32>
    %107 = vector.extract_strided_slice %100 {offsets = [6, 0, 0], sizes = [2, 8, 8], strides = [1, 1, 1]} : vector<8x8x8xf32> to vector<2x8x8xf32>
    %108 = vector.shape_cast %107 : vector<2x8x8xf32> to vector<16x8xf32>
    %109 = tpu.concatenate %102, %104, %106, %108 in 1 : vector<16x8xf32>, vector<16x8xf32>, vector<16x8xf32>, vector<16x8xf32> -> vector<16x32xf32>
    %110 = arith.truncf %109 : vector<16x32xf32> to vector<16x32xbf16>
    %111 = vector.extract_strided_slice %50 {offsets = [0, 96], sizes = [32, 32], strides = [1, 1]} : vector<32x128xbf16> to vector<32x32xbf16>
    %cst_26 = arith.constant dense<0.000000e+00> : vector<16x32xf32>
    %112 = tpu.matmul %110, %111, %cst_26 {dimension_numbers = #tpu.dot_dimension_numbers<[1], [0], [0], [1], [0, 0, 1, 1], [], []>} : vector<16x32xbf16>, vector<32x32xbf16>, vector<16x32xf32> -> vector<16x32xf32>
    %113 = vector.extract_strided_slice %0 {offsets = [3, 0], sizes = [1, 32], strides = [1, 1]} : vector<24x128xf32> to vector<1x32xf32>
    %114 = vector.broadcast %113 : vector<1x32xf32> to vector<16x32xf32>
    %115 = arith.addf %112, %114 : vector<16x32xf32>
    %116 = arith.addf %40, %115 : vector<16x32xf32>
    %117 = vector.extract_strided_slice %0 {offsets = [4, 0], sizes = [1, 32], strides = [1, 1]} : vector<24x128xf32> to vector<1x32xf32>
    %118 = vector.extract_strided_slice %0 {offsets = [5, 0], sizes = [1, 32], strides = [1, 1]} : vector<24x128xf32> to vector<1x32xf32>
    %cst_27 = arith.constant dense<0.000000e+00> : vector<16xf32>
    %119 = vector.multi_reduction <add>, %116, %cst_27 [1] : vector<16x32xf32> to vector<16xf32>
    %120 = vector.shape_cast %119 : vector<16xf32> to vector<16x1xf32>
    %cst_28 = arith.constant 3.200000e+01 : f32
    %121 = vector.broadcast %cst_28 : f32 to vector<16x1xf32>
    %122 = arith.divf %120, %121 : vector<16x1xf32>
    %123 = vector.broadcast %122 : vector<16x1xf32> to vector<16x32xf32>
    %124 = arith.subf %116, %123 : vector<16x32xf32>
    %125 = arith.mulf %124, %124 : vector<16x32xf32>
    %cst_29 = arith.constant dense<0.000000e+00> : vector<16xf32>
    %126 = vector.multi_reduction <add>, %125, %cst_29 [1] : vector<16x32xf32> to vector<16xf32>
    %127 = vector.shape_cast %126 : vector<16xf32> to vector<16x1xf32>
    %cst_30 = arith.constant 3.200000e+01 : f32
    %128 = vector.broadcast %cst_30 : f32 to vector<16x1xf32>
    %129 = arith.divf %127, %128 : vector<16x1xf32>
    %130 = vector.broadcast %122 : vector<16x1xf32> to vector<16x32xf32>
    %131 = arith.subf %116, %130 : vector<16x32xf32>
    %cst_31 = arith.constant 9.99999996E-13 : f32
    %132 = vector.broadcast %cst_31 : f32 to vector<16x1xf32>
    %133 = arith.addf %129, %132 : vector<16x1xf32>
    %134 = math.rsqrt %133 : vector<16x1xf32>
    %135 = vector.broadcast %134 : vector<16x1xf32> to vector<16x32xf32>
    %136 = arith.mulf %131, %135 : vector<16x32xf32>
    %137 = vector.broadcast %117 : vector<1x32xf32> to vector<16x32xf32>
    %138 = arith.mulf %136, %137 : vector<16x32xf32>
    %139 = vector.broadcast %118 : vector<1x32xf32> to vector<16x32xf32>
    %140 = arith.addf %138, %139 : vector<16x32xf32>
    %141 = vector.extract_strided_slice %2 {offsets = [0, 0, 0], sizes = [1, 96, 64], strides = [1, 1, 1]} : vector<2x96x64xbf16> to vector<1x96x64xbf16>
    %142 = vector.shape_cast %141 : vector<1x96x64xbf16> to vector<96x64xbf16>
    %143 = arith.truncf %140 : vector<16x32xf32> to vector<16x32xbf16>
    %144 = vector.extract_strided_slice %142 {offsets = [0, 0], sizes = [32, 64], strides = [1, 1]} : vector<96x64xbf16> to vector<32x64xbf16>
    %cst_32 = arith.constant dense<0.000000e+00> : vector<16x64xf32>
    %145 = tpu.matmul %143, %144, %cst_32 {dimension_numbers = #tpu.dot_dimension_numbers<[1], [0], [0], [1], [0, 0, 1, 1], [], []>} : vector<16x32xbf16>, vector<32x64xbf16>, vector<16x64xf32> -> vector<16x64xf32>
    %146 = vector.extract_strided_slice %0 {offsets = [6, 0], sizes = [1, 64], strides = [1, 1]} : vector<24x128xf32> to vector<1x64xf32>
    %147 = vector.broadcast %146 : vector<1x64xf32> to vector<16x64xf32>
    %148 = arith.addf %145, %147 : vector<16x64xf32>
    %cst_33 = arith.constant 5.000000e-01 : f32
    %149 = vector.broadcast %cst_33 : f32 to vector<16x64xf32>
    %150 = arith.mulf %149, %148 : vector<16x64xf32>
    %cst_34 = arith.constant 4.471500e-02 : f32
    %151 = vector.broadcast %cst_34 : f32 to vector<16x64xf32>
    %152 = arith.mulf %151, %148 : vector<16x64xf32>
    %153 = arith.mulf %152, %148 : vector<16x64xf32>
    %154 = arith.mulf %153, %148 : vector<16x64xf32>
    %155 = arith.addf %148, %154 : vector<16x64xf32>
    %cst_35 = arith.constant 0.797884583 : f32
    %156 = vector.broadcast %cst_35 : f32 to vector<16x64xf32>
    %157 = arith.mulf %156, %155 : vector<16x64xf32>
    %158 = math.tanh %157 : vector<16x64xf32>
    %cst_36 = arith.constant 1.000000e+00 : f32
    %159 = vector.broadcast %cst_36 : f32 to vector<16x64xf32>
    %160 = arith.addf %159, %158 : vector<16x64xf32>
    %161 = arith.mulf %150, %160 : vector<16x64xf32>
    %162 = arith.truncf %161 : vector<16x64xf32> to vector<16x64xbf16>
    %163 = vector.extract_strided_slice %142 {offsets = [32, 0], sizes = [64, 32], strides = [1, 1]} : vector<96x64xbf16> to vector<64x32xbf16>
    %cst_37 = arith.constant dense<0.000000e+00> : vector<16x32xf32>
    %164 = tpu.matmul %162, %163, %cst_37 {dimension_numbers = #tpu.dot_dimension_numbers<[1], [0], [0], [1], [0, 0, 1, 1], [], []>} : vector<16x64xbf16>, vector<64x32xbf16>, vector<16x32xf32> -> vector<16x32xf32>
    %165 = vector.extract_strided_slice %0 {offsets = [9, 0], sizes = [1, 32], strides = [1, 1]} : vector<24x128xf32> to vector<1x32xf32>
    %166 = vector.broadcast %165 : vector<1x32xf32> to vector<16x32xf32>
    %167 = arith.addf %164, %166 : vector<16x32xf32>
    %168 = arith.addf %140, %167 : vector<16x32xf32>
    %169 = vector.extract_strided_slice %0 {offsets = [7, 0], sizes = [1, 32], strides = [1, 1]} : vector<24x128xf32> to vector<1x32xf32>
    %170 = vector.extract_strided_slice %0 {offsets = [8, 0], sizes = [1, 32], strides = [1, 1]} : vector<24x128xf32> to vector<1x32xf32>
    %cst_38 = arith.constant dense<0.000000e+00> : vector<16xf32>
    %171 = vector.multi_reduction <add>, %168, %cst_38 [1] : vector<16x32xf32> to vector<16xf32>
    %172 = vector.shape_cast %171 : vector<16xf32> to vector<16x1xf32>
    %cst_39 = arith.constant 3.200000e+01 : f32
    %173 = vector.broadcast %cst_39 : f32 to vector<16x1xf32>
    %174 = arith.divf %172, %173 : vector<16x1xf32>
    %175 = vector.broadcast %174 : vector<16x1xf32> to vector<16x32xf32>
    %176 = arith.subf %168, %175 : vector<16x32xf32>
    %177 = arith.mulf %176, %176 : vector<16x32xf32>
    %cst_40 = arith.constant dense<0.000000e+00> : vector<16xf32>
    %178 = vector.multi_reduction <add>, %177, %cst_40 [1] : vector<16x32xf32> to vector<16xf32>
    %179 = vector.shape_cast %178 : vector<16xf32> to vector<16x1xf32>
    %cst_41 = arith.constant 3.200000e+01 : f32
    %180 = vector.broadcast %cst_41 : f32 to vector<16x1xf32>
    %181 = arith.divf %179, %180 : vector<16x1xf32>
    %182 = vector.broadcast %174 : vector<16x1xf32> to vector<16x32xf32>
    %183 = arith.subf %168, %182 : vector<16x32xf32>
    %cst_42 = arith.constant 9.99999996E-13 : f32
    %184 = vector.broadcast %cst_42 : f32 to vector<16x1xf32>
    %185 = arith.addf %181, %184 : vector<16x1xf32>
    %186 = math.rsqrt %185 : vector<16x1xf32>
    %187 = vector.broadcast %186 : vector<16x1xf32> to vector<16x32xf32>
    %188 = arith.mulf %183, %187 : vector<16x32xf32>
    %189 = vector.broadcast %169 : vector<1x32xf32> to vector<16x32xf32>
    %190 = arith.mulf %188, %189 : vector<16x32xf32>
    %191 = vector.broadcast %170 : vector<1x32xf32> to vector<16x32xf32>
    %192 = arith.addf %190, %191 : vector<16x32xf32>
    %193 = vector.extract_strided_slice %1 {offsets = [1, 0, 0], sizes = [1, 32, 128], strides = [1, 1, 1]} : vector<2x32x128xbf16> to vector<1x32x128xbf16>
    %194 = vector.shape_cast %193 : vector<1x32x128xbf16> to vector<32x128xbf16>
    %195 = arith.truncf %192 : vector<16x32xf32> to vector<16x32xbf16>
    %196 = vector.extract_strided_slice %194 {offsets = [0, 0], sizes = [32, 96], strides = [1, 1]} : vector<32x128xbf16> to vector<32x96xbf16>
    %cst_43 = arith.constant dense<0.000000e+00> : vector<16x96xf32>
    %197 = tpu.matmul %195, %196, %cst_43 {dimension_numbers = #tpu.dot_dimension_numbers<[1], [0], [0], [1], [0, 0, 1, 1], [], []>} : vector<16x32xbf16>, vector<32x96xbf16>, vector<16x96xf32> -> vector<16x96xf32>
    %198 = vector.extract_strided_slice %0 {offsets = [10, 0], sizes = [1, 96], strides = [1, 1]} : vector<24x128xf32> to vector<1x96xf32>
    %199 = vector.broadcast %198 : vector<1x96xf32> to vector<16x96xf32>
    %200 = arith.addf %197, %199 : vector<16x96xf32>
    %201 = vector.extract_strided_slice %200 {offsets = [0, 0], sizes = [16, 8], strides = [1, 1]} : vector<16x96xf32> to vector<16x8xf32>
    %202 = vector.shape_cast %201 : vector<16x8xf32> to vector<2x8x8xf32>
    %203 = vector.extract_strided_slice %200 {offsets = [0, 8], sizes = [16, 8], strides = [1, 1]} : vector<16x96xf32> to vector<16x8xf32>
    %204 = vector.shape_cast %203 : vector<16x8xf32> to vector<2x8x8xf32>
    %205 = vector.extract_strided_slice %200 {offsets = [0, 16], sizes = [16, 8], strides = [1, 1]} : vector<16x96xf32> to vector<16x8xf32>
    %206 = vector.shape_cast %205 : vector<16x8xf32> to vector<2x8x8xf32>
    %207 = vector.extract_strided_slice %200 {offsets = [0, 24], sizes = [16, 8], strides = [1, 1]} : vector<16x96xf32> to vector<16x8xf32>
    %208 = vector.shape_cast %207 : vector<16x8xf32> to vector<2x8x8xf32>
    %209 = tpu.concatenate %202, %204, %206, %208 in 0 : vector<2x8x8xf32>, vector<2x8x8xf32>, vector<2x8x8xf32>, vector<2x8x8xf32> -> vector<8x8x8xf32>
    %210 = vector.extract_strided_slice %200 {offsets = [0, 32], sizes = [16, 8], strides = [1, 1]} : vector<16x96xf32> to vector<16x8xf32>
    %211 = vector.shape_cast %210 : vector<16x8xf32> to vector<2x8x8xf32>
    %212 = vector.extract_strided_slice %200 {offsets = [0, 40], sizes = [16, 8], strides = [1, 1]} : vector<16x96xf32> to vector<16x8xf32>
    %213 = vector.shape_cast %212 : vector<16x8xf32> to vector<2x8x8xf32>
    %214 = vector.extract_strided_slice %200 {offsets = [0, 48], sizes = [16, 8], strides = [1, 1]} : vector<16x96xf32> to vector<16x8xf32>
    %215 = vector.shape_cast %214 : vector<16x8xf32> to vector<2x8x8xf32>
    %216 = vector.extract_strided_slice %200 {offsets = [0, 56], sizes = [16, 8], strides = [1, 1]} : vector<16x96xf32> to vector<16x8xf32>
    %217 = vector.shape_cast %216 : vector<16x8xf32> to vector<2x8x8xf32>
    %218 = tpu.concatenate %211, %213, %215, %217 in 0 : vector<2x8x8xf32>, vector<2x8x8xf32>, vector<2x8x8xf32>, vector<2x8x8xf32> -> vector<8x8x8xf32>
    %219 = vector.extract_strided_slice %200 {offsets = [0, 64], sizes = [16, 8], strides = [1, 1]} : vector<16x96xf32> to vector<16x8xf32>
    %220 = vector.shape_cast %219 : vector<16x8xf32> to vector<2x8x8xf32>
    %221 = vector.extract_strided_slice %200 {offsets = [0, 72], sizes = [16, 8], strides = [1, 1]} : vector<16x96xf32> to vector<16x8xf32>
    %222 = vector.shape_cast %221 : vector<16x8xf32> to vector<2x8x8xf32>
    %223 = vector.extract_strided_slice %200 {offsets = [0, 80], sizes = [16, 8], strides = [1, 1]} : vector<16x96xf32> to vector<16x8xf32>
    %224 = vector.shape_cast %223 : vector<16x8xf32> to vector<2x8x8xf32>
    %225 = vector.extract_strided_slice %200 {offsets = [0, 88], sizes = [16, 8], strides = [1, 1]} : vector<16x96xf32> to vector<16x8xf32>
    %226 = vector.shape_cast %225 : vector<16x8xf32> to vector<2x8x8xf32>
    %227 = tpu.concatenate %220, %222, %224, %226 in 0 : vector<2x8x8xf32>, vector<2x8x8xf32>, vector<2x8x8xf32>, vector<2x8x8xf32> -> vector<8x8x8xf32>
    %228 = arith.truncf %209 : vector<8x8x8xf32> to vector<8x8x8xbf16>
    %229 = arith.truncf %218 : vector<8x8x8xf32> to vector<8x8x8xbf16>
    %cst_44 = arith.constant dense<0.000000e+00> : vector<8x8x8xf32>
    %230 = tpu.matmul %228, %229, %cst_44 {dimension_numbers = #tpu.dot_dimension_numbers<[2], [2], [1], [1], [0, 0, 0, 1, 1, 1], [0], [0]>} : vector<8x8x8xbf16>, vector<8x8x8xbf16>, vector<8x8x8xf32> -> vector<8x8x8xf32>
    %231 = arith.addf %230, %48 : vector<8x8x8xf32>
    %cst_45 = arith.constant dense<0xFF800000> : vector<8x8xf32>
    %232 = vector.multi_reduction <maximumf>, %231, %cst_45 [2] : vector<8x8x8xf32> to vector<8x8xf32>
    %233 = vector.shape_cast %232 : vector<8x8xf32> to vector<8x8x1xf32>
    %234 = vector.broadcast %233 : vector<8x8x1xf32> to vector<8x8x8xf32>
    %235 = arith.subf %231, %234 : vector<8x8x8xf32>
    %236 = math.exp %235 : vector<8x8x8xf32>
    %cst_46 = arith.constant dense<0.000000e+00> : vector<8x8xf32>
    %237 = vector.multi_reduction <add>, %236, %cst_46 [2] : vector<8x8x8xf32> to vector<8x8xf32>
    %238 = vector.shape_cast %237 : vector<8x8xf32> to vector<8x8x1xf32>
    %239 = tpu.reciprocal %238 {approx = true} : vector<8x8x1xf32> -> vector<8x8x1xf32>
    %240 = vector.broadcast %239 : vector<8x8x1xf32> to vector<8x8x8xf32>
    %241 = arith.mulf %236, %240 : vector<8x8x8xf32>
    %242 = arith.truncf %241 : vector<8x8x8xf32> to vector<8x8x8xbf16>
    %243 = arith.truncf %227 : vector<8x8x8xf32> to vector<8x8x8xbf16>
    %cst_47 = arith.constant dense<0.000000e+00> : vector<8x8x8xf32>
    %244 = tpu.matmul %242, %243, %cst_47 {dimension_numbers = #tpu.dot_dimension_numbers<[2], [1], [1], [2], [0, 0, 0, 1, 1, 2], [0], [0]>} : vector<8x8x8xbf16>, vector<8x8x8xbf16>, vector<8x8x8xf32> -> vector<8x8x8xf32>
    %245 = vector.extract_strided_slice %244 {offsets = [0, 0, 0], sizes = [2, 8, 8], strides = [1, 1, 1]} : vector<8x8x8xf32> to vector<2x8x8xf32>
    %246 = vector.shape_cast %245 : vector<2x8x8xf32> to vector<16x8xf32>
    %247 = vector.extract_strided_slice %244 {offsets = [2, 0, 0], sizes = [2, 8, 8], strides = [1, 1, 1]} : vector<8x8x8xf32> to vector<2x8x8xf32>
    %248 = vector.shape_cast %247 : vector<2x8x8xf32> to vector<16x8xf32>
    %249 = vector.extract_strided_slice %244 {offsets = [4, 0, 0], sizes = [2, 8, 8], strides = [1, 1, 1]} : vector<8x8x8xf32> to vector<2x8x8xf32>
    %250 = vector.shape_cast %249 : vector<2x8x8xf32> to vector<16x8xf32>
    %251 = vector.extract_strided_slice %244 {offsets = [6, 0, 0], sizes = [2, 8, 8], strides = [1, 1, 1]} : vector<8x8x8xf32> to vector<2x8x8xf32>
    %252 = vector.shape_cast %251 : vector<2x8x8xf32> to vector<16x8xf32>
    %253 = tpu.concatenate %246, %248, %250, %252 in 1 : vector<16x8xf32>, vector<16x8xf32>, vector<16x8xf32>, vector<16x8xf32> -> vector<16x32xf32>
    %254 = arith.truncf %253 : vector<16x32xf32> to vector<16x32xbf16>
    %255 = vector.extract_strided_slice %194 {offsets = [0, 96], sizes = [32, 32], strides = [1, 1]} : vector<32x128xbf16> to vector<32x32xbf16>
    %cst_48 = arith.constant dense<0.000000e+00> : vector<16x32xf32>
    %256 = tpu.matmul %254, %255, %cst_48 {dimension_numbers = #tpu.dot_dimension_numbers<[1], [0], [0], [1], [0, 0, 1, 1], [], []>} : vector<16x32xbf16>, vector<32x32xbf16>, vector<16x32xf32> -> vector<16x32xf32>
    %257 = vector.extract_strided_slice %0 {offsets = [11, 0], sizes = [1, 32], strides = [1, 1]} : vector<24x128xf32> to vector<1x32xf32>
    %258 = vector.broadcast %257 : vector<1x32xf32> to vector<16x32xf32>
    %259 = arith.addf %256, %258 : vector<16x32xf32>
    %260 = arith.addf %192, %259 : vector<16x32xf32>
    %261 = vector.extract_strided_slice %0 {offsets = [12, 0], sizes = [1, 32], strides = [1, 1]} : vector<24x128xf32> to vector<1x32xf32>
    %262 = vector.extract_strided_slice %0 {offsets = [13, 0], sizes = [1, 32], strides = [1, 1]} : vector<24x128xf32> to vector<1x32xf32>
    %cst_49 = arith.constant dense<0.000000e+00> : vector<16xf32>
    %263 = vector.multi_reduction <add>, %260, %cst_49 [1] : vector<16x32xf32> to vector<16xf32>
    %264 = vector.shape_cast %263 : vector<16xf32> to vector<16x1xf32>
    %cst_50 = arith.constant 3.200000e+01 : f32
    %265 = vector.broadcast %cst_50 : f32 to vector<16x1xf32>
    %266 = arith.divf %264, %265 : vector<16x1xf32>
    %267 = vector.broadcast %266 : vector<16x1xf32> to vector<16x32xf32>
    %268 = arith.subf %260, %267 : vector<16x32xf32>
    %269 = arith.mulf %268, %268 : vector<16x32xf32>
    %cst_51 = arith.constant dense<0.000000e+00> : vector<16xf32>
    %270 = vector.multi_reduction <add>, %269, %cst_51 [1] : vector<16x32xf32> to vector<16xf32>
    %271 = vector.shape_cast %270 : vector<16xf32> to vector<16x1xf32>
    %cst_52 = arith.constant 3.200000e+01 : f32
    %272 = vector.broadcast %cst_52 : f32 to vector<16x1xf32>
    %273 = arith.divf %271, %272 : vector<16x1xf32>
    %274 = vector.broadcast %266 : vector<16x1xf32> to vector<16x32xf32>
    %275 = arith.subf %260, %274 : vector<16x32xf32>
    %cst_53 = arith.constant 9.99999996E-13 : f32
    %276 = vector.broadcast %cst_53 : f32 to vector<16x1xf32>
    %277 = arith.addf %273, %276 : vector<16x1xf32>
    %278 = math.rsqrt %277 : vector<16x1xf32>
    %279 = vector.broadcast %278 : vector<16x1xf32> to vector<16x32xf32>
    %280 = arith.mulf %275, %279 : vector<16x32xf32>
    %281 = vector.broadcast %261 : vector<1x32xf32> to vector<16x32xf32>
    %282 = arith.mulf %280, %281 : vector<16x32xf32>
    %283 = vector.broadcast %262 : vector<1x32xf32> to vector<16x32xf32>
    %284 = arith.addf %282, %283 : vector<16x32xf32>
    %285 = vector.extract_strided_slice %2 {offsets = [1, 0, 0], sizes = [1, 96, 64], strides = [1, 1, 1]} : vector<2x96x64xbf16> to vector<1x96x64xbf16>
    %286 = vector.shape_cast %285 : vector<1x96x64xbf16> to vector<96x64xbf16>
    %287 = arith.truncf %284 : vector<16x32xf32> to vector<16x32xbf16>
    %288 = vector.extract_strided_slice %286 {offsets = [0, 0], sizes = [32, 64], strides = [1, 1]} : vector<96x64xbf16> to vector<32x64xbf16>
    %cst_54 = arith.constant dense<0.000000e+00> : vector<16x64xf32>
    %289 = tpu.matmul %287, %288, %cst_54 {dimension_numbers = #tpu.dot_dimension_numbers<[1], [0], [0], [1], [0, 0, 1, 1], [], []>} : vector<16x32xbf16>, vector<32x64xbf16>, vector<16x64xf32> -> vector<16x64xf32>
    %290 = vector.extract_strided_slice %0 {offsets = [14, 0], sizes = [1, 64], strides = [1, 1]} : vector<24x128xf32> to vector<1x64xf32>
    %291 = vector.broadcast %290 : vector<1x64xf32> to vector<16x64xf32>
    %292 = arith.addf %289, %291 : vector<16x64xf32>
    %cst_55 = arith.constant 5.000000e-01 : f32
    %293 = vector.broadcast %cst_55 : f32 to vector<16x64xf32>
    %294 = arith.mulf %293, %292 : vector<16x64xf32>
    %cst_56 = arith.constant 4.471500e-02 : f32
    %295 = vector.broadcast %cst_56 : f32 to vector<16x64xf32>
    %296 = arith.mulf %295, %292 : vector<16x64xf32>
    %297 = arith.mulf %296, %292 : vector<16x64xf32>
    %298 = arith.mulf %297, %292 : vector<16x64xf32>
    %299 = arith.addf %292, %298 : vector<16x64xf32>
    %cst_57 = arith.constant 0.797884583 : f32
    %300 = vector.broadcast %cst_57 : f32 to vector<16x64xf32>
    %301 = arith.mulf %300, %299 : vector<16x64xf32>
    %302 = math.tanh %301 : vector<16x64xf32>
    %cst_58 = arith.constant 1.000000e+00 : f32
    %303 = vector.broadcast %cst_58 : f32 to vector<16x64xf32>
    %304 = arith.addf %303, %302 : vector<16x64xf32>
    %305 = arith.mulf %294, %304 : vector<16x64xf32>
    %306 = arith.truncf %305 : vector<16x64xf32> to vector<16x64xbf16>
    %307 = vector.extract_strided_slice %286 {offsets = [32, 0], sizes = [64, 32], strides = [1, 1]} : vector<96x64xbf16> to vector<64x32xbf16>
    %cst_59 = arith.constant dense<0.000000e+00> : vector<16x32xf32>
    %308 = tpu.matmul %306, %307, %cst_59 {dimension_numbers = #tpu.dot_dimension_numbers<[1], [0], [0], [1], [0, 0, 1, 1], [], []>} : vector<16x64xbf16>, vector<64x32xbf16>, vector<16x32xf32> -> vector<16x32xf32>
    %309 = vector.extract_strided_slice %0 {offsets = [17, 0], sizes = [1, 32], strides = [1, 1]} : vector<24x128xf32> to vector<1x32xf32>
    %310 = vector.broadcast %309 : vector<1x32xf32> to vector<16x32xf32>
    %311 = arith.addf %308, %310 : vector<16x32xf32>
    %312 = arith.addf %284, %311 : vector<16x32xf32>
    %313 = vector.extract_strided_slice %0 {offsets = [15, 0], sizes = [1, 32], strides = [1, 1]} : vector<24x128xf32> to vector<1x32xf32>
    %314 = vector.extract_strided_slice %0 {offsets = [16, 0], sizes = [1, 32], strides = [1, 1]} : vector<24x128xf32> to vector<1x32xf32>
    %cst_60 = arith.constant dense<0.000000e+00> : vector<16xf32>
    %315 = vector.multi_reduction <add>, %312, %cst_60 [1] : vector<16x32xf32> to vector<16xf32>
    %316 = vector.shape_cast %315 : vector<16xf32> to vector<16x1xf32>
    %cst_61 = arith.constant 3.200000e+01 : f32
    %317 = vector.broadcast %cst_61 : f32 to vector<16x1xf32>
    %318 = arith.divf %316, %317 : vector<16x1xf32>
    %319 = vector.broadcast %318 : vector<16x1xf32> to vector<16x32xf32>
    %320 = arith.subf %312, %319 : vector<16x32xf32>
    %321 = arith.mulf %320, %320 : vector<16x32xf32>
    %cst_62 = arith.constant dense<0.000000e+00> : vector<16xf32>
    %322 = vector.multi_reduction <add>, %321, %cst_62 [1] : vector<16x32xf32> to vector<16xf32>
    %323 = vector.shape_cast %322 : vector<16xf32> to vector<16x1xf32>
    %cst_63 = arith.constant 3.200000e+01 : f32
    %324 = vector.broadcast %cst_63 : f32 to vector<16x1xf32>
    %325 = arith.divf %323, %324 : vector<16x1xf32>
    %326 = vector.broadcast %318 : vector<16x1xf32> to vector<16x32xf32>
    %327 = arith.subf %312, %326 : vector<16x32xf32>
    %cst_64 = arith.constant 9.99999996E-13 : f32
    %328 = vector.broadcast %cst_64 : f32 to vector<16x1xf32>
    %329 = arith.addf %325, %328 : vector<16x1xf32>
    %330 = math.rsqrt %329 : vector<16x1xf32>
    %331 = vector.broadcast %330 : vector<16x1xf32> to vector<16x32xf32>
    %332 = arith.mulf %327, %331 : vector<16x32xf32>
    %333 = vector.broadcast %313 : vector<1x32xf32> to vector<16x32xf32>
    %334 = arith.mulf %332, %333 : vector<16x32xf32>
    %335 = vector.broadcast %314 : vector<1x32xf32> to vector<16x32xf32>
    %336 = arith.addf %334, %335 : vector<16x32xf32>
    %337 = arith.truncf %336 : vector<16x32xf32> to vector<16x32xbf16>
    %c0_65 = arith.constant 0 : index
    %c0_66 = arith.constant 0 : index
    %338 = vector.load %arg5[%c0_65, %c0_66] : memref<32x128xbf16, #tpu.memory_space<vmem>>, vector<32x128xbf16>
    %cst_67 = arith.constant dense<0.000000e+00> : vector<16x128xf32>
    %339 = tpu.matmul %337, %338, %cst_67 {dimension_numbers = #tpu.dot_dimension_numbers<[1], [0], [0], [1], [0, 0, 1, 1], [], []>} : vector<16x32xbf16>, vector<32x128xbf16>, vector<16x128xf32> -> vector<16x128xf32>
    %340 = vector.extract_strided_slice %339 {offsets = [0, 0], sizes = [1, 128], strides = [1, 1]} : vector<16x128xf32> to vector<1x128xf32>
    %341 = vector.extract_strided_slice %339 {offsets = [8, 0], sizes = [1, 128], strides = [1, 1]} : vector<16x128xf32> to vector<1x128xf32>
    %342 = tpu.concatenate %340, %341 in 0 : vector<1x128xf32>, vector<1x128xf32> -> vector<2x128xf32>
    %343 = vector.extract_strided_slice %342 {offsets = [0, 0], sizes = [2, 6], strides = [1, 1]} : vector<2x128xf32> to vector<2x6xf32>
    %344 = vector.extract_strided_slice %0 {offsets = [18, 0], sizes = [1, 6], strides = [1, 1]} : vector<24x128xf32> to vector<1x6xf32>
    %345 = vector.broadcast %344 : vector<1x6xf32> to vector<2x6xf32>
    %346 = arith.addf %343, %345 : vector<2x6xf32>
    %347 = arith.negf %346 : vector<2x6xf32>
    %348 = math.exp %347 : vector<2x6xf32>
    %cst_68 = arith.constant 1.000000e+00 : f32
    %349 = vector.broadcast %cst_68 : f32 to vector<2x6xf32>
    %350 = arith.addf %349, %348 : vector<2x6xf32>
    %351 = arith.divf %349, %350 : vector<2x6xf32>
    %c0_69 = arith.constant 0 : index
    %c0_70 = arith.constant 0 : index
    %352 = vector.load %arg7[%c0_69, %c0_70] : memref<2x6xf32, #tpu.memory_space<vmem>>, vector<2x6xf32>
    tpu.vector_store %arg7[%c0_69, %c0_70], %351 {strides = array<i32>} : memref<2x6xf32, #tpu.memory_space<vmem>>, vector<2x6xf32>,
    return
  }
}

</mosaic_0001>

<llo_original>
// kernel: multilabel_transformer_forward.1
$region0: #{multilabel_transformer_forward.1}
  #allocation0 [shape = 'u32[]', space=smem, size = 0x4, offset = 0x4, fixed_abs, tag = 'smem constant byte address 0x4 - core index']
  #allocation1 [shape = 'u32[72,128]{1,0:T(1,128)}', space=vmem, size = 0x9000, scoped, tag = 'internal scratch']
  %s0 = inlined_call_operand.vmem [shape: s32[16,2], index: 0, kind: input, shape index: {}]
  %s1 = inlined_call_operand.vmem [shape: f32[2,1,8], index: 1, kind: input, shape index: {}]
  %s2 = inlined_call_operand.vmem [shape: bf16[144,32], index: 2, kind: input, shape index: {}]
  %s3 = inlined_call_operand.vmem [shape: bf16[2,32,128], index: 3, kind: input, shape index: {}]
  %s4 = inlined_call_operand.vmem [shape: bf16[2,96,64], index: 4, kind: input, shape index: {}]
  %s5 = inlined_call_operand.vmem [shape: bf16[32,128], index: 5, kind: input, shape index: {}]
  %s6 = inlined_call_operand.vmem [shape: f32[24,128], index: 6, kind: input, shape index: {}]
  %s7 = inlined_call_operand.hbm [shape: f32[2,6], index: 7, kind: output, shape index: {}]
  %s8 = sld [smem:[#allocation0]]
  $region38: #{multilabel_transformer_forward.1} parent=0
    _
  %s10 = ssub.s32 1, %s8
  %s11 = scalar_select 0, %s10, %s8
  $region1: #{multilabel_transformer_forward.1} parent=0
    #allocation2 [shape = 'u8[1024]{0}', space=vmem, size = 0x400, scoped, tag = 'output window, operand 0, single buffered']
    #allocation3 [shape = 's32[1]{0}', space=sflag, size = 0x4, scoped, tag = 'scoped memory for multilabel_transformer_forward.1']
    %12 = vsyncpa [#allocation3], 0
    // Predicated region
    $region2: #{multilabel_transformer_forward.1} parent=1 // pred_check
      _
    $region3: #{multilabel_transformer_forward.1} parent=1 // pred_check_branch
      %14 = sbr.rel (0) target = $region5
    $region4: #{multilabel_transformer_forward.1} parent=1 // pred_region
      _
    $region5: #{multilabel_transformer_forward.1} parent=1 // pred_fallthru
      _
    // Predicated region
    $region6: #{multilabel_transformer_forward.1} parent=1 // pred_check
      _
    $region7: #{multilabel_transformer_forward.1} parent=1 // pred_check_branch
      %16 = sbr.rel (0) target = $region9
    $region8: #{multilabel_transformer_forward.1} parent=1 // pred_region
      _
    $region9: #{multilabel_transformer_forward.1} parent=1 // pred_fallthru
      _
    // Predicated region
    $region10: #{multilabel_transformer_forward.1} parent=1 // pred_check
      _
    $region11: #{multilabel_transformer_forward.1} parent=1 // pred_check_branch
      %18 = sbr.rel (0) target = $region13
    $region12: #{multilabel_transformer_forward.1} parent=1 // pred_region
      _
    $region13: #{multilabel_transformer_forward.1} parent=1 // pred_fallthru
      _
    // Predicated region
    $region14: #{multilabel_transformer_forward.1} parent=1 // pred_check
      _
    $region15: #{multilabel_transformer_forward.1} parent=1 // pred_check_branch
      %20 = sbr.rel (0) target = $region17
    $region16: #{multilabel_transformer_forward.1} parent=1 // pred_region
      _
    $region17: #{multilabel_transformer_forward.1} parent=1 // pred_fallthru
      _
    // Predicated region
    $region18: #{multilabel_transformer_forward.1} parent=1 // pred_check
      _
    $region19: #{multilabel_transformer_forward.1} parent=1 // pred_check_branch
      %22 = sbr.rel (0) target = $region21
    $region20: #{multilabel_transformer_forward.1} parent=1 // pred_region
      _
    $region21: #{multilabel_transformer_forward.1} parent=1 // pred_fallthru
      _
    // Predicated region
    $region22: #{multilabel_transformer_forward.1} parent=1 // pred_check
      _
    $region23: #{multilabel_transformer_forward.1} parent=1 // pred_check_branch
      %24 = sbr.rel (0) target = $region25
    $region24: #{multilabel_transformer_forward.1} parent=1 // pred_region
      _
    $region25: #{multilabel_transformer_forward.1} parent=1 // pred_fallthru
      _
    // Predicated region
    $region26: #{multilabel_transformer_forward.1} parent=1 // pred_check
      _
    $region27: #{multilabel_transformer_forward.1} parent=1 // pred_check_branch
      %26 = sbr.rel (0) target = $region29
    $region28: #{multilabel_transformer_forward.1} parent=1 // pred_region
      _
    $region29: #{multilabel_transformer_forward.1} parent=1 // pred_fallthru
      _
    %v28 = vld [vmem:[%s6] sm:$0xff]
    %v29 = vld [vmem:[%s6 + $0x8] sm:$0xff]
    %v30 = vld [vmem:[%s6 + $0x10] sm:$0xff]
    %v31 = vld [vmem:[%s3] sm:$0xf]
    %v32 = vld [vmem:[%s3 + $0x4] sm:$0xf]
    %v33 = vld [vmem:[%s3 + $0x8] sm:$0xf]
    %v34 = vld [vmem:[%s3 + $0xc] sm:$0xf]
    %v35 = vld [vmem:[%s3 + $0x10] sm:$0xf]
    %v36 = vld [vmem:[%s3 + $0x14] sm:$0xf]
    %v37 = vld [vmem:[%s3 + $0x18] sm:$0xf]
    %v38 = vld [vmem:[%s3 + $0x1c] sm:$0xf]
    %v39 = vld [vmem:[%s4] sm:$0xf]
    %v40 = vld [vmem:[%s4 + $0x4] sm:$0xf]
    %v41 = vld [vmem:[%s4 + $0x8] sm:$0xf]
    %v42 = vld [vmem:[%s4 + $0xc] sm:$0xf]
    %v43 = vld [vmem:[%s4 + $0x10] sm:$0xf]
    %v44 = vld [vmem:[%s4 + $0x14] sm:$0xf]
    %v45 = vld [vmem:[%s4 + $0x18] sm:$0xf]
    %v46 = vld [vmem:[%s4 + $0x1c] sm:$0xf]
    %v47 = vld [vmem:[%s4 + $0x20] sm:$0xf]
    %v48 = vld [vmem:[%s4 + $0x24] sm:$0xf]
    %v49 = vld [vmem:[%s4 + $0x28] sm:$0xf]
    %v50 = vld [vmem:[%s4 + $0x2c] sm:$0xf]
    %v51 = vld [vmem:[%s4 + $0x30] sm:$0xf]
    %v52 = vld [vmem:[%s4 + $0x34] sm:$0xf]
    %v53 = vld [vmem:[%s4 + $0x38] sm:$0xf]
    %v54 = vld [vmem:[%s4 + $0x3c] sm:$0xf]
    %v55 = vld [vmem:[%s4 + $0x40] sm:$0xf]
    %v56 = vld [vmem:[%s4 + $0x44] sm:$0xf]
    %v57 = vld [vmem:[%s4 + $0x48] sm:$0xf]
    %v58 = vld [vmem:[%s4 + $0x4c] sm:$0xf]
    %v59 = vld [vmem:[%s4 + $0x50] sm:$0xf]
    %v60 = vld [vmem:[%s4 + $0x54] sm:$0xf]
    %v61 = vld [vmem:[%s4 + $0x58] sm:$0xf]
    %v62 = vld [vmem:[%s4 + $0x5c] sm:$0xf]
    %v63 = vld [vmem:[%s0] sm:$0xff]
    %v64 = vld [vmem:[%s0 + $0x8] sm:$0xff]
    %v65 = vlaneseq
    %v66 = vand.u32 %v65, 127
    %v67 = vadd.s32 %v66, 128
    %68 = vset.pattern.permute.xlu0 0
    %69 = vperm.xlu0 %68, %v63
    %v70 = vpop.permute.xlu0 %69
    %71 = vset.pattern.permute.xlu0 0
    %72 = vperm.xlu0 %71, %v64
    %v73 = vpop.permute.xlu0 %72
    %vm74 = vcmp.eq.s32.totalorder %v66, %v70
    %vm75 = vcmp.eq.s32.totalorder %v67, %v70
    %vm76 = vcmp.eq.s32.totalorder %v66, %v73
    %vm77 = vcmp.eq.s32.totalorder %v67, %v73
    %78 = vset.pattern.permute.xlu0 1
    %79 = vperm.xlu0 %78, %v63
    %v80 = vpop.permute.xlu0 %79
    %81 = vset.pattern.permute.xlu0 1
    %82 = vperm.xlu0 %81, %v64
    %v83 = vpop.permute.xlu0 %82
    %vm84 = vcmp.eq.s32.totalorder %v66, %v80
    %vm85 = vcmp.eq.s32.totalorder %v67, %v80
    %vm86 = vcmp.eq.s32.totalorder %v66, %v83
    %vm87 = vcmp.eq.s32.totalorder %v67, %v83
    %vm88 = vmor %vm74, %vm84
    %vm89 = vmor %vm75, %vm85
    %vm90 = vmor %vm76, %vm86
    %vm91 = vmor %vm77, %vm87
    %v92 = vsel %vm88, 1, 0
    %v93 = vsel %vm89, 1, 0
    %v94 = vsel %vm90, 1, 0
    %v95 = vsel %vm91, 1, 0
    %v96 = vcvt.s32.f32 %v92
    %v97 = vcvt.s32.f32 %v93
    %v98 = vcvt.s32.f32 %v94
    %v99 = vcvt.s32.f32 %v95
    %v100 = vpack.c.bf16 %v98, %v96
    %v101 = vpack.c.bf16 %v99, %v97
    %v102 = vld [vmem:[%s2] sm:$0xf]
    %v103 = vld [vmem:[%s2 + $0x4] sm:$0xf]
    %v104 = vld [vmem:[%s2 + $0x8] sm:$0xf]
    %v105 = vld [vmem:[%s2 + $0xc] sm:$0xf]
    %v106 = vld [vmem:[%s2 + $0x10] sm:$0xf]
    %v107 = vld [vmem:[%s2 + $0x14] sm:$0xf]
    %v108 = vld [vmem:[%s2 + $0x18] sm:$0xf]
    %v109 = vld [vmem:[%s2 + $0x1c] sm:$0xf]
    %v110 = vld [vmem:[%s2 + $0x20] sm:$0xf]
    %v111 = vld [vmem:[%s2 + $0x24] sm:$0xf]
    %v112 = vld [vmem:[%s2 + $0x28] sm:$0xf]
    %v113 = vld [vmem:[%s2 + $0x2c] sm:$0xf]
    %v114 = vld [vmem:[%s2 + $0x30] sm:$0xf]
    %v115 = vld [vmem:[%s2 + $0x34] sm:$0xf]
    %v116 = vld [vmem:[%s2 + $0x38] sm:$0xf]
    %v117 = vld [vmem:[%s2 + $0x3c] sm:$0xf]
    %v118 = vld [vmem:[%s2 + $0x40] sm:$0xf]
    %v119 = vld [vmem:[%s2 + $0x44] sm:$0xf]
    %v138 = vunpack.c.l.b16 %v102
    %v139 = vunpack.c.l.b16 %v103
    %v140 = vunpack.c.l.b16 %v104
    %v141 = vunpack.c.l.b16 %v105
    %v142 = vunpack.c.l.b16 %v106
    %v143 = vunpack.c.l.b16 %v107
    %v144 = vunpack.c.l.b16 %v108
    %v145 = vunpack.c.l.b16 %v109
    %v146 = vunpack.c.l.b16 %v110
    %v147 = vunpack.c.l.b16 %v111
    %v148 = vunpack.c.l.b16 %v112
    %v149 = vunpack.c.l.b16 %v113
    %v150 = vunpack.c.l.b16 %v114
    %v151 = vunpack.c.l.b16 %v115
    %v152 = vunpack.c.l.b16 %v116
    %v153 = vunpack.c.l.b16 %v117
    %v154 = vunpack.c.l.b16 %v118
    %v155 = vunpack.c.l.b16 %v119
    %v156 = vpack.c.b16 %v139, %v138
    %v157 = vpack.c.b16 %v141, %v140
    %v158 = vpack.c.b16 %v143, %v142
    %v159 = vpack.c.b16 %v145, %v144
    %v160 = vpack.c.b16 %v147, %v146
    %v161 = vpack.c.b16 %v149, %v148
    %v162 = vpack.c.b16 %v151, %v150
    %v163 = vpack.c.b16 %v153, %v152
    %v164 = vpack.c.b16 %v155, %v154
    %vm174 = vcmask 130048
    %v176 = vsel %vm174, %v101, 0
    %178 = vmatpush.bf16.msra.mxu0 %v163
    %179 = vmatpush.bf16.msra.mxu0 %v162
    %180 = vmatpush.bf16.msra.mxu0 %v161
    %181 = vmatpush.bf16.msra.mxu0 %v160
    %182 = vmatpush.bf16.msra.mxu0 %v159
    %183 = vmatpush.bf16.msra.mxu0 %v158
    %184 = vmatpush.bf16.msra.mxu0 %v157
    %185 = vmatpush.bf16.msra.mxu0 %v156
    %186 = vmatmul.bf16.gmra.mxu0 %v100
    %v187 = vpop.f32.mrf.mxu0
    %v188 = vadd.f32 0.0, %v187
    %v189 = vpop.f32.mrf.mxu0
    %v190 = vadd.f32 0.0, %v189
    %191 = vdwg.mxu0
    %192 = vmatpush.bf16.msra.mxu0 0
    %193 = vmatpush.bf16.msra.mxu0 0
    %194 = vmatpush.bf16.msra.mxu0 0
    %195 = vmatpush.bf16.msra.mxu0 0
    %196 = vmatpush.bf16.msra.mxu0 0
    %197 = vmatpush.bf16.msra.mxu0 0
    %198 = vmatpush.bf16.msra.mxu0 0
    %199 = vmatpush.bf16.msra.mxu0 %v164
    %200 = vmatmul.bf16.gmra.mxu0 %v176
    %v201 = vpop.f32.mrf.mxu0
    %v202 = vadd.f32 %v188, %v201
    %v203 = vpop.f32.mrf.mxu0
    %v204 = vadd.f32 %v190, %v203
    %205 = vdwg.mxu0
    %vm206 = vcmask 261120
    %v207 = vsel %vm206, %v202, 0.0
    %208 = vadd.xlane.f32.xlu0 %v207
    %v209 = vpop.xlane.xlu0 %208
    %v210 = vsel %vm206, %v204, 0.0
    %211 = vadd.xlane.f32.xlu0 %v210
    %v212 = vpop.xlane.xlu0 %211
    %v213 = vrcp.pop 32.0
    %v214 = vmul.f32 32.0, %v213
    %v215 = vsub.f32 1.0, %v214
    %v216 = vmul.f32 %v213, %v215
    %v217 = vadd.f32 %v213, %v216
    %vm218 = vweird.f32 %v213
    %v219 = vsel %vm218, %v213, %v217
    %v220 = vmul.f32 %v209, %v219
    %v221 = vmul.f32 %v212, %v219
    %v222 = vsub.f32 %v202, %v220
    %v223 = vsub.f32 %v204, %v221
    %v224 = vmul.f32 %v222, %v222
    %v225 = vmul.f32 %v223, %v223
    %v226 = vsel %vm206, %v224, 0.0
    %227 = vadd.xlane.f32.xlu0 %v226
    %v228 = vpop.xlane.xlu0 %227
    %v229 = vsel %vm206, %v225, 0.0
    %230 = vadd.xlane.f32.xlu0 %v229
    %v231 = vpop.xlane.xlu0 %230
    %v232 = vmul.f32 %v228, %v219
    %v233 = vmul.f32 %v231, %v219
    %v234 = vadd.f32 %v232, 1e-12
    %v235 = vadd.f32 %v233, 1e-12
    %v236 = vrsqrt.pop %v234
    %v237 = vmul.f32 %v236, %v234
    %v238 = vmul.f32 %v237, %v236
    %v239 = vmul.f32 0.5, %v238
    %v240 = vsub.f32 1.5, %v239
    %v241 = vmul.f32 %v236, %v240
    %vm242 = vweird.f32 %v234
    %vm243 = vweird.f32 %v236
    %vm244 = vmor %vm242, %vm243
    %v245 = vsel %vm244, %v236, %v241
    %v246 = vrsqrt.pop %v235
    %v247 = vmul.f32 %v246, %v235
    %v248 = vmul.f32 %v247, %v246
    %v249 = vmul.f32 0.5, %v248
    %v250 = vsub.f32 1.5, %v249
    %v251 = vmul.f32 %v246, %v250
    %vm252 = vweird.f32 %v235
    %vm253 = vweird.f32 %v246
    %vm254 = vmor %vm252, %vm253
    %v255 = vsel %vm254, %v246, %v251
    %v256 = vmul.f32 %v222, %v245
    %v257 = vmul.f32 %v223, %v255
    %v258 = vperm.slane %v28, 0
    %v259 = vmul.f32 %v256, %v258
    %v260 = vmul.f32 %v257, %v258
    %v261 = vperm.slane %v28, 1
    %v262 = vadd.f32 %v259, %v261
    %v263 = vadd.f32 %v260, %v261
    %v264 = vld [vmem:[%s1] sm:$0x1]
    %v265 = vld [vmem:[%s1 + $0x1] sm:$0x1]
    %v266 = vsub.f32 1.0, %v264
    %v267 = vsub.f32 1.0, %v265
    %v268 = vmul.f32 %v266, -1e+09
    %v269 = vmul.f32 %v267, -1e+09
    %v272 = vperm.slane %v268, 0
    %v273 = vperm.slane %v269, 0
    %v276 = vpack.c.bf16 %v263, %v262
    %v277 = vperm.slane %v28, 2
    %v282 = vunpack.c.l.b16 %v31
    %v283 = vunpack.c.l.b16 %v32
    %v284 = vunpack.c.l.b16 %v33
    %v285 = vunpack.c.l.b16 %v34
    %v286 = vpack.c.b16 %v283, %v282
    %v287 = vpack.c.b16 %v285, %v284
    %v291 = vsel %vm206, %v276, 0
    %293 = vmatpush.bf16.msra.mxu0 0
    %294 = vmatpush.bf16.msra.mxu0 0
    %295 = vmatpush.bf16.msra.mxu0 0
    %296 = vmatpush.bf16.msra.mxu0 0
    %297 = vmatpush.bf16.msra.mxu0 0
    %298 = vmatpush.bf16.msra.mxu0 0
    %299 = vmatpush.bf16.msra.mxu0 %v287
    %300 = vmatpush.bf16.msra.mxu0 %v286
    %301 = vmatmul.bf16.gmra.mxu0 %v291
    %v302 = vpop.f32.mrf.mxu0
    %v303 = vadd.f32 %v277, %v302
    %v304 = vpop.f32.mrf.mxu0
    %v305 = vadd.f32 %v277, %v304
    %306 = vdwg.mxu0
    %309 = vrot.lane.b32.xlu0 %v303, 120
    %v310 = vpop.permute.xlu0 %309
    %311 = vrot.lane.b32.xlu0 %v305, 120
    %v312 = vpop.permute.xlu0 %311
    %315 = vrot.lane.b32.xlu0 %v303, 112
    %v316 = vpop.permute.xlu0 %315
    %317 = vrot.lane.b32.xlu0 %v305, 112
    %v318 = vpop.permute.xlu0 %317
    %321 = vrot.lane.b32.xlu0 %v303, 104
    %v322 = vpop.permute.xlu0 %321
    %323 = vrot.lane.b32.xlu0 %v305, 104
    %v324 = vpop.permute.xlu0 %323
    %v327 = vpack.c.bf16 %v303, %v303
    %v328 = vpack.c.bf16 %v305, %v305
    %v329 = vpack.c.bf16 %v310, %v310
    %v330 = vpack.c.bf16 %v312, %v312
    %v331 = vpack.c.bf16 %v316, %v316
    %v332 = vpack.c.bf16 %v318, %v318
    %v333 = vpack.c.bf16 %v322, %v322
    %v334 = vpack.c.bf16 %v324, %v324
    %v336 = vunpack.c.l.b16 %v327
    %v337 = vpack.c.b16 %v336, %v336
    %338 = vrot.lane.b32.xlu0 %v337, 96
    %v339 = vpop.permute.xlu0 %338
    %vm340 = vcmask 64512
    %v342 = vsel %vm340, %v327, 0
    %v345 = vsel %vm340, %v339, 0
    %347 = vmatpush.bf16.xpose.msra.mxu0 0
    %348 = vmatpush.bf16.xpose.msra.mxu0 0
    %349 = vmatpush.bf16.xpose.msra.mxu0 0
    %350 = vmatpush.bf16.xpose.msra.mxu0 0
    %351 = vmatpush.bf16.xpose.msra.mxu0 0
    %352 = vmatpush.bf16.xpose.msra.mxu0 0
    %353 = vmatpush.bf16.xpose.msra.mxu0 0
    %354 = vmatpush.bf16.xpose.msra.mxu0 %v345
    %355 = vmatmul.bf16.gmra.mxu0 %v342
    %v356 = vpop.f32.mrf.mxu0
    %v357 = vadd.f32 %v272, %v356
    %v358 = vpop.f32.mrf.mxu0
    %359 = vdwg.mxu0
    %v361 = vunpack.c.l.b16 %v328
    %v362 = vpack.c.b16 %v361, %v361
    %363 = vrot.lane.b32.xlu0 %v362, 96
    %v364 = vpop.permute.xlu0 %363
    %v366 = vsel %vm340, %v328, 0
    %v369 = vsel %vm340, %v364, 0
    %371 = vmatpush.bf16.xpose.msra.mxu0 0
    %372 = vmatpush.bf16.xpose.msra.mxu0 0
    %373 = vmatpush.bf16.xpose.msra.mxu0 0
    %374 = vmatpush.bf16.xpose.msra.mxu0 0
    %375 = vmatpush.bf16.xpose.msra.mxu0 0
    %376 = vmatpush.bf16.xpose.msra.mxu0 0
    %377 = vmatpush.bf16.xpose.msra.mxu0 0
    %378 = vmatpush.bf16.xpose.msra.mxu0 %v369
    %379 = vmatmul.bf16.gmra.mxu0 %v366
    %v380 = vpop.f32.mrf.mxu0
    %v381 = vadd.f32 %v273, %v380
    %v382 = vpop.f32.mrf.mxu0
    %383 = vdwg.mxu0
    %v385 = vunpack.c.l.b16 %v329
    %v386 = vpack.c.b16 %v385, %v385
    %387 = vrot.lane.b32.xlu0 %v386, 96
    %v388 = vpop.permute.xlu0 %387
    %v390 = vsel %vm340, %v329, 0
    %v393 = vsel %vm340, %v388, 0
    %395 = vmatpush.bf16.xpose.msra.mxu0 0
    %396 = vmatpush.bf16.xpose.msra.mxu0 0
    %397 = vmatpush.bf16.xpose.msra.mxu0 0
    %398 = vmatpush.bf16.xpose.msra.mxu0 0
    %399 = vmatpush.bf16.xpose.msra.mxu0 0
    %400 = vmatpush.bf16.xpose.msra.mxu0 0
    %401 = vmatpush.bf16.xpose.msra.mxu0 0
    %402 = vmatpush.bf16.xpose.msra.mxu0 %v393
    %403 = vmatmul.bf16.gmra.mxu0 %v390
    %v404 = vpop.f32.mrf.mxu0
    %v405 = vadd.f32 %v272, %v404
    %v406 = vpop.f32.mrf.mxu0
    %407 = vdwg.mxu0
    %v409 = vunpack.c.l.b16 %v330
    %v410 = vpack.c.b16 %v409, %v409
    %411 = vrot.lane.b32.xlu0 %v410, 96
    %v412 = vpop.permute.xlu0 %411
    %v414 = vsel %vm340, %v330, 0
    %v417 = vsel %vm340, %v412, 0
    %419 = vmatpush.bf16.xpose.msra.mxu0 0
    %420 = vmatpush.bf16.xpose.msra.mxu0 0
    %421 = vmatpush.bf16.xpose.msra.mxu0 0
    %422 = vmatpush.bf16.xpose.msra.mxu0 0
    %423 = vmatpush.bf16.xpose.msra.mxu0 0
    %424 = vmatpush.bf16.xpose.msra.mxu0 0
    %425 = vmatpush.bf16.xpose.msra.mxu0 0
    %426 = vmatpush.bf16.xpose.msra.mxu0 %v417
    %427 = vmatmul.bf16.gmra.mxu0 %v414
    %v428 = vpop.f32.mrf.mxu0
    %v429 = vadd.f32 %v273, %v428
    %v430 = vpop.f32.mrf.mxu0
    %431 = vdwg.mxu0
    %v433 = vunpack.c.l.b16 %v331
    %v434 = vpack.c.b16 %v433, %v433
    %435 = vrot.lane.b32.xlu0 %v434, 96
    %v436 = vpop.permute.xlu0 %435
    %v438 = vsel %vm340, %v331, 0
    %v441 = vsel %vm340, %v436, 0
    %443 = vmatpush.bf16.xpose.msra.mxu0 0
    %444 = vmatpush.bf16.xpose.msra.mxu0 0
    %445 = vmatpush.bf16.xpose.msra.mxu0 0
    %446 = vmatpush.bf16.xpose.msra.mxu0 0
    %447 = vmatpush.bf16.xpose.msra.mxu0 0
    %448 = vmatpush.bf16.xpose.msra.mxu0 0
    %449 = vmatpush.bf16.xpose.msra.mxu0 0
    %450 = vmatpush.bf16.xpose.msra.mxu0 %v441
    %451 = vmatmul.bf16.gmra.mxu0 %v438
    %v452 = vpop.f32.mrf.mxu0
    %v453 = vadd.f32 %v272, %v452
    %v454 = vpop.f32.mrf.mxu0
    %455 = vdwg.mxu0
    %v457 = vunpack.c.l.b16 %v332
    %v458 = vpack.c.b16 %v457, %v457
    %459 = vrot.lane.b32.xlu0 %v458, 96
    %v460 = vpop.permute.xlu0 %459
    %v462 = vsel %vm340, %v332, 0
    %v465 = vsel %vm340, %v460, 0
    %467 = vmatpush.bf16.xpose.msra.mxu0 0
    %468 = vmatpush.bf16.xpose.msra.mxu0 0
    %469 = vmatpush.bf16.xpose.msra.mxu0 0
    %470 = vmatpush.bf16.xpose.msra.mxu0 0
    %471 = vmatpush.bf16.xpose.msra.mxu0 0
    %472 = vmatpush.bf16.xpose.msra.mxu0 0
    %473 = vmatpush.bf16.xpose.msra.mxu0 0
    %474 = vmatpush.bf16.xpose.msra.mxu0 %v465
    %475 = vmatmul.bf16.gmra.mxu0 %v462
    %v476 = vpop.f32.mrf.mxu0
    %v477 = vadd.f32 %v273, %v476
    %v478 = vpop.f32.mrf.mxu0
    %479 = vdwg.mxu0
    %v481 = vunpack.c.l.b16 %v333
    %v482 = vpack.c.b16 %v481, %v481
    %483 = vrot.lane.b32.xlu0 %v482, 96
    %v484 = vpop.permute.xlu0 %483
    %v486 = vsel %vm340, %v333, 0
    %v489 = vsel %vm340, %v484, 0
    %491 = vmatpush.bf16.xpose.msra.mxu0 0
    %492 = vmatpush.bf16.xpose.msra.mxu0 0
    %493 = vmatpush.bf16.xpose.msra.mxu0 0
    %494 = vmatpush.bf16.xpose.msra.mxu0 0
    %495 = vmatpush.bf16.xpose.msra.mxu0 0
    %496 = vmatpush.bf16.xpose.msra.mxu0 0
    %497 = vmatpush.bf16.xpose.msra.mxu0 0
    %498 = vmatpush.bf16.xpose.msra.mxu0 %v489
    %499 = vmatmul.bf16.gmra.mxu0 %v486
    %v500 = vpop.f32.mrf.mxu0
    %v501 = vadd.f32 %v272, %v500
    %v502 = vpop.f32.mrf.mxu0
    %503 = vdwg.mxu0
    %v505 = vunpack.c.l.b16 %v334
    %v506 = vpack.c.b16 %v505, %v505
    %507 = vrot.lane.b32.xlu0 %v506, 96
    %v508 = vpop.permute.xlu0 %507
    %v510 = vsel %vm340, %v334, 0
    %v513 = vsel %vm340, %v508, 0
    %515 = vmatpush.bf16.xpose.msra.mxu0 0
    %516 = vmatpush.bf16.xpose.msra.mxu0 0
    %517 = vmatpush.bf16.xpose.msra.mxu0 0
    %518 = vmatpush.bf16.xpose.msra.mxu0 0
    %519 = vmatpush.bf16.xpose.msra.mxu0 0
    %520 = vmatpush.bf16.xpose.msra.mxu0 0
    %521 = vmatpush.bf16.xpose.msra.mxu0 0
    %522 = vmatpush.bf16.xpose.msra.mxu0 %v513
    %523 = vmatmul.bf16.gmra.mxu0 %v510
    %v524 = vpop.f32.mrf.mxu0
    %v525 = vadd.f32 %v273, %v524
    %v526 = vpop.f32.mrf.mxu0
    %527 = vdwg.mxu0
    %v528 = vsel %vm340, %v357, -inf
    %529 = vmax.xlane.f32.xlu0 %v528
    %v530 = vpop.xlane.xlu0 %529
    %v531 = vsel %vm340, %v381, -inf
    %532 = vmax.xlane.f32.xlu0 %v531
    %v533 = vpop.xlane.xlu0 %532
    %v534 = vsel %vm340, %v405, -inf
    %535 = vmax.xlane.f32.xlu0 %v534
    %v536 = vpop.xlane.xlu0 %535
    %v537 = vsel %vm340, %v429, -inf
    %538 = vmax.xlane.f32.xlu0 %v537
    %v539 = vpop.xlane.xlu0 %538
    %v540 = vsel %vm340, %v453, -inf
    %541 = vmax.xlane.f32.xlu0 %v540
    %v542 = vpop.xlane.xlu0 %541
    %v543 = vsel %vm340, %v477, -inf
    %544 = vmax.xlane.f32.xlu0 %v543
    %v545 = vpop.xlane.xlu0 %544
    %v546 = vsel %vm340, %v501, -inf
    %547 = vmax.xlane.f32.xlu0 %v546
    %v548 = vpop.xlane.xlu0 %547
    %v549 = vsel %vm340, %v525, -inf
    %550 = vmax.xlane.f32.xlu0 %v549
    %v551 = vpop.xlane.xlu0 %550
    %v552 = vsub.f32 %v357, %v530
    %v553 = vsub.f32 %v381, %v533
    %v554 = vsub.f32 %v405, %v536
    %v555 = vsub.f32 %v429, %v539
    %v556 = vsub.f32 %v453, %v542
    %v557 = vsub.f32 %v477, %v545
    %v558 = vsub.f32 %v501, %v548
    %v559 = vsub.f32 %v525, %v551
    %v560 = vmul.f32 %v552, 1.442695
    %v561 = vpow.pop %v560
    %v562 = vmul.f32 %v553, 1.442695
    %v563 = vpow.pop %v562
    %v564 = vmul.f32 %v554, 1.442695
    %v565 = vpow.pop %v564
    %v566 = vmul.f32 %v555, 1.442695
    %v567 = vpow.pop %v566
    %v568 = vmul.f32 %v556, 1.442695
    %v569 = vpow.pop %v568
    %v570 = vmul.f32 %v557, 1.442695
    %v571 = vpow.pop %v570
    %v572 = vmul.f32 %v558, 1.442695
    %v573 = vpow.pop %v572
    %v574 = vmul.f32 %v559, 1.442695
    %v575 = vpow.pop %v574
    %v576 = vsel %vm340, %v561, 0.0
    %577 = vadd.xlane.f32.xlu0 %v576
    %v578 = vpop.xlane.xlu0 %577
    %v579 = vsel %vm340, %v563, 0.0
    %580 = vadd.xlane.f32.xlu0 %v579
    %v581 = vpop.xlane.xlu0 %580
    %v582 = vsel %vm340, %v565, 0.0
    %583 = vadd.xlane.f32.xlu0 %v582
    %v584 = vpop.xlane.xlu0 %583
    %v585 = vsel %vm340, %v567, 0.0
    %586 = vadd.xlane.f32.xlu0 %v585
    %v587 = vpop.xlane.xlu0 %586
    %v588 = vsel %vm340, %v569, 0.0
    %589 = vadd.xlane.f32.xlu0 %v588
    %v590 = vpop.xlane.xlu0 %589
    %v591 = vsel %vm340, %v571, 0.0
    %592 = vadd.xlane.f32.xlu0 %v591
    %v593 = vpop.xlane.xlu0 %592
    %v594 = vsel %vm340, %v573, 0.0
    %595 = vadd.xlane.f32.xlu0 %v594
    %v596 = vpop.xlane.xlu0 %595
    %v597 = vsel %vm340, %v575, 0.0
    %598 = vadd.xlane.f32.xlu0 %v597
    %v599 = vpop.xlane.xlu0 %598
    %v600 = vrcp.pop %v578
    %v601 = vrcp.pop %v581
    %v602 = vrcp.pop %v584
    %v603 = vrcp.pop %v587
    %v604 = vrcp.pop %v590
    %v605 = vrcp.pop %v593
    %v606 = vrcp.pop %v596
    %v607 = vrcp.pop %v599
    %v608 = vmul.f32 %v561, %v600
    %v609 = vmul.f32 %v563, %v601
    %v610 = vmul.f32 %v565, %v602
    %v611 = vmul.f32 %v567, %v603
    %v612 = vmul.f32 %v569, %v604
    %v613 = vmul.f32 %v571, %v605
    %v614 = vmul.f32 %v573, %v606
    %v615 = vmul.f32 %v575, %v607
    %v616 = vpack.c.bf16 %v608, %v608
    %v617 = vpack.c.bf16 %v609, %v609
    %v618 = vpack.c.bf16 %v610, %v610
    %v619 = vpack.c.bf16 %v611, %v611
    %v620 = vpack.c.bf16 %v612, %v612
    %v621 = vpack.c.bf16 %v613, %v613
    %v622 = vpack.c.bf16 %v614, %v614
    %v623 = vpack.c.bf16 %v615, %v615
    %624 = vrot.lane.b32.xlu0 %v337, 64
    %v625 = vpop.permute.xlu0 %624
    %v627 = vsel %vm340, %v616, 0
    %vm629 = vcmask 1043456
    %v631 = vsel %vm629, %v625, 0
    %633 = vmatpush.bf16.msra.mxu0 0
    %634 = vmatpush.bf16.msra.mxu0 0
    %635 = vmatpush.bf16.msra.mxu0 0
    %636 = vmatpush.bf16.msra.mxu0 0
    %637 = vmatpush.bf16.msra.mxu0 0
    %638 = vmatpush.bf16.msra.mxu0 0
    %639 = vmatpush.bf16.msra.mxu0 0
    %640 = vmatpush.bf16.msra.mxu0 %v631
    %641 = vmatmul.bf16.gmra.mxu0 %v627
    %v642 = vpop.f32.mrf.mxu0
    %v643 = vadd.f32 0.0, %v642
    %v644 = vpop.f32.mrf.mxu0
    %645 = vdwg.mxu0
    %646 = vrot.lane.b32.xlu0 %v362, 64
    %v647 = vpop.permute.xlu0 %646
    %v649 = vsel %vm340, %v617, 0
    %v652 = vsel %vm629, %v647, 0
    %654 = vmatpush.bf16.msra.mxu0 0
    %655 = vmatpush.bf16.msra.mxu0 0
    %656 = vmatpush.bf16.msra.mxu0 0
    %657 = vmatpush.bf16.msra.mxu0 0
    %658 = vmatpush.bf16.msra.mxu0 0
    %659 = vmatpush.bf16.msra.mxu0 0
    %660 = vmatpush.bf16.msra.mxu0 0
    %661 = vmatpush.bf16.msra.mxu0 %v652
    %662 = vmatmul.bf16.gmra.mxu0 %v649
    %v663 = vpop.f32.mrf.mxu0
    %v664 = vadd.f32 0.0, %v663
    %v665 = vpop.f32.mrf.mxu0
    %666 = vdwg.mxu0
    %667 = vrot.lane.b32.xlu0 %v386, 64
    %v668 = vpop.permute.xlu0 %667
    %v670 = vsel %vm340, %v618, 0
    %v673 = vsel %vm629, %v668, 0
    %675 = vmatpush.bf16.msra.mxu0 0
    %676 = vmatpush.bf16.msra.mxu0 0
    %677 = vmatpush.bf16.msra.mxu0 0
    %678 = vmatpush.bf16.msra.mxu0 0
    %679 = vmatpush.bf16.msra.mxu0 0
    %680 = vmatpush.bf16.msra.mxu0 0
    %681 = vmatpush.bf16.msra.mxu0 0
    %682 = vmatpush.bf16.msra.mxu0 %v673
    %683 = vmatmul.bf16.gmra.mxu0 %v670
    %v684 = vpop.f32.mrf.mxu0
    %v685 = vadd.f32 0.0, %v684
    %v686 = vpop.f32.mrf.mxu0
    %687 = vdwg.mxu0
    %688 = vrot.lane.b32.xlu0 %v410, 64
    %v689 = vpop.permute.xlu0 %688
    %v691 = vsel %vm340, %v619, 0
    %v694 = vsel %vm629, %v689, 0
    %696 = vmatpush.bf16.msra.mxu0 0
    %697 = vmatpush.bf16.msra.mxu0 0
    %698 = vmatpush.bf16.msra.mxu0 0
    %699 = vmatpush.bf16.msra.mxu0 0
    %700 = vmatpush.bf16.msra.mxu0 0
    %701 = vmatpush.bf16.msra.mxu0 0
    %702 = vmatpush.bf16.msra.mxu0 0
    %703 = vmatpush.bf16.msra.mxu0 %v694
    %704 = vmatmul.bf16.gmra.mxu0 %v691
    %v705 = vpop.f32.mrf.mxu0
    %v706 = vadd.f32 0.0, %v705
    %v707 = vpop.f32.mrf.mxu0
    %708 = vdwg.mxu0
    %709 = vrot.lane.b32.xlu0 %v434, 64
    %v710 = vpop.permute.xlu0 %709
    %v712 = vsel %vm340, %v620, 0
    %v715 = vsel %vm629, %v710, 0
    %717 = vmatpush.bf16.msra.mxu0 0
    %718 = vmatpush.bf16.msra.mxu0 0
    %719 = vmatpush.bf16.msra.mxu0 0
    %720 = vmatpush.bf16.msra.mxu0 0
    %721 = vmatpush.bf16.msra.mxu0 0
    %722 = vmatpush.bf16.msra.mxu0 0
    %723 = vmatpush.bf16.msra.mxu0 0
    %724 = vmatpush.bf16.msra.mxu0 %v715
    %725 = vmatmul.bf16.gmra.mxu0 %v712
    %v726 = vpop.f32.mrf.mxu0
    %v727 = vadd.f32 0.0, %v726
    %v728 = vpop.f32.mrf.mxu0
    %729 = vdwg.mxu0
    %730 = vrot.lane.b32.xlu0 %v458, 64
    %v731 = vpop.permute.xlu0 %730
    %v733 = vsel %vm340, %v621, 0
    %v736 = vsel %vm629, %v731, 0
    %738 = vmatpush.bf16.msra.mxu0 0
    %739 = vmatpush.bf16.msra.mxu0 0
    %740 = vmatpush.bf16.msra.mxu0 0
    %741 = vmatpush.bf16.msra.mxu0 0
    %742 = vmatpush.bf16.msra.mxu0 0
    %743 = vmatpush.bf16.msra.mxu0 0
    %744 = vmatpush.bf16.msra.mxu0 0
    %745 = vmatpush.bf16.msra.mxu0 %v736
    %746 = vmatmul.bf16.gmra.mxu0 %v733
    %v747 = vpop.f32.mrf.mxu0
    %v748 = vadd.f32 0.0, %v747
    %v749 = vpop.f32.mrf.mxu0
    %750 = vdwg.mxu0
    %751 = vrot.lane.b32.xlu0 %v482, 64
    %v752 = vpop.permute.xlu0 %751
    %v754 = vsel %vm340, %v622, 0
    %v757 = vsel %vm629, %v752, 0
    %759 = vmatpush.bf16.msra.mxu0 0
    %760 = vmatpush.bf16.msra.mxu0 0
    %761 = vmatpush.bf16.msra.mxu0 0
    %762 = vmatpush.bf16.msra.mxu0 0
    %763 = vmatpush.bf16.msra.mxu0 0
    %764 = vmatpush.bf16.msra.mxu0 0
    %765 = vmatpush.bf16.msra.mxu0 0
    %766 = vmatpush.bf16.msra.mxu0 %v757
    %767 = vmatmul.bf16.gmra.mxu0 %v754
    %v768 = vpop.f32.mrf.mxu0
    %v769 = vadd.f32 0.0, %v768
    %v770 = vpop.f32.mrf.mxu0
    %771 = vdwg.mxu0
    %772 = vrot.lane.b32.xlu0 %v506, 64
    %v773 = vpop.permute.xlu0 %772
    %v775 = vsel %vm340, %v623, 0
    %v778 = vsel %vm629, %v773, 0
    %780 = vmatpush.bf16.msra.mxu0 0
    %781 = vmatpush.bf16.msra.mxu0 0
    %782 = vmatpush.bf16.msra.mxu0 0
    %783 = vmatpush.bf16.msra.mxu0 0
    %784 = vmatpush.bf16.msra.mxu0 0
    %785 = vmatpush.bf16.msra.mxu0 0
    %786 = vmatpush.bf16.msra.mxu0 0
    %787 = vmatpush.bf16.msra.mxu0 %v778
    %788 = vmatmul.bf16.gmra.mxu0 %v775
    %v789 = vpop.f32.mrf.mxu0
    %v790 = vadd.f32 0.0, %v789
    %v791 = vpop.f32.mrf.mxu0
    %792 = vdwg.mxu0
    %795 = vrot.lane.b32.xlu0 %v685, 8
    %v796 = vpop.permute.xlu0 %795
    %797 = vrot.lane.b32.xlu0 %v706, 8
    %v798 = vpop.permute.xlu0 %797
    %803 = vrot.lane.b32.xlu0 %v727, 16
    %v804 = vpop.permute.xlu0 %803
    %805 = vrot.lane.b32.xlu0 %v748, 16
    %v806 = vpop.permute.xlu0 %805
    %811 = vrot.lane.b32.xlu0 %v769, 24
    %v812 = vpop.permute.xlu0 %811
    %813 = vrot.lane.b32.xlu0 %v790, 24
    %v814 = vpop.permute.xlu0 %813
    %v817 = vsel %vm340, %v643, %v796
    %v818 = vsel %vm340, %v664, %v798
    %v819 = vsel %vm174, %v817, %v804
    %v820 = vsel %vm174, %v818, %v806
    %vm821 = vcmask 195584
    %v822 = vsel %vm821, %v819, %v812
    %v823 = vsel %vm821, %v820, %v814
    %v824 = vpack.c.bf16 %v823, %v822
    %v825 = vperm.slane %v28, 3
    %826 = vrot.lane.b32.xlu0 %v286, 32
    %v827 = vpop.permute.xlu0 %826
    %828 = vrot.lane.b32.xlu0 %v287, 32
    %v829 = vpop.permute.xlu0 %828
    %v833 = vsel %vm206, %v824, 0
    %835 = vmatpush.bf16.msra.mxu0 0
    %836 = vmatpush.bf16.msra.mxu0 0
    %837 = vmatpush.bf16.msra.mxu0 0
    %838 = vmatpush.bf16.msra.mxu0 0
    %839 = vmatpush.bf16.msra.mxu0 0
    %840 = vmatpush.bf16.msra.mxu0 0
    %841 = vmatpush.bf16.msra.mxu0 %v829
    %842 = vmatpush.bf16.msra.mxu0 %v827
    %843 = vmatmul.bf16.gmra.mxu0 %v833
    %v844 = vpop.f32.mrf.mxu0
    %v845 = vadd.f32 %v825, %v844
    %v846 = vpop.f32.mrf.mxu0
    %v847 = vadd.f32 %v825, %v846
    %848 = vdwg.mxu0
    %v849 = vadd.f32 %v262, %v845
    %v850 = vadd.f32 %v263, %v847
    %v851 = vsel %vm206, %v849, 0.0
    %852 = vadd.xlane.f32.xlu0 %v851
    %v853 = vpop.xlane.xlu0 %852
    %v854 = vsel %vm206, %v850, 0.0
    %855 = vadd.xlane.f32.xlu0 %v854
    %v856 = vpop.xlane.xlu0 %855
    %v857 = vmul.f32 %v853, %v219
    %v858 = vmul.f32 %v856, %v219
    %v859 = vsub.f32 %v849, %v857
    %v860 = vsub.f32 %v850, %v858
    %v861 = vmul.f32 %v859, %v859
    %v862 = vmul.f32 %v860, %v860
    %v863 = vsel %vm206, %v861, 0.0
    %864 = vadd.xlane.f32.xlu0 %v863
    %v865 = vpop.xlane.xlu0 %864
    %v866 = vsel %vm206, %v862, 0.0
    %867 = vadd.xlane.f32.xlu0 %v866
    %v868 = vpop.xlane.xlu0 %867
    %v869 = vmul.f32 %v865, %v219
    %v870 = vmul.f32 %v868, %v219
    %v871 = vadd.f32 %v869, 1e-12
    %v872 = vadd.f32 %v870, 1e-12
    %v873 = vrsqrt.pop %v871
    %v874 = vmul.f32 %v873, %v871
    %v875 = vmul.f32 %v874, %v873
    %v876 = vmul.f32 0.5, %v875
    %v877 = vsub.f32 1.5, %v876
    %v878 = vmul.f32 %v873, %v877
    %vm879 = vweird.f32 %v871
    %vm880 = vweird.f32 %v873
    %vm881 = vmor %vm879, %vm880
    %v882 = vsel %vm881, %v873, %v878
    %v883 = vrsqrt.pop %v872
    %v884 = vmul.f32 %v883, %v872
    %v885 = vmul.f32 %v884, %v883
    %v886 = vmul.f32 0.5, %v885
    %v887 = vsub.f32 1.5, %v886
    %v888 = vmul.f32 %v883, %v887
    %vm889 = vweird.f32 %v872
    %vm890 = vweird.f32 %v883
    %vm891 = vmor %vm889, %vm890
    %v892 = vsel %vm891, %v883, %v888
    %v893 = vmul.f32 %v859, %v882
    %v894 = vmul.f32 %v860, %v892
    %v895 = vperm.slane %v28, 4
    %v896 = vmul.f32 %v893, %v895
    %v897 = vmul.f32 %v894, %v895
    %v898 = vperm.slane %v28, 5
    %v899 = vadd.f32 %v896, %v898
    %v900 = vadd.f32 %v897, %v898
    %v901 = vpack.c.bf16 %v900, %v899
    %v902 = vperm.slane %v28, 6
    %v907 = vunpack.c.l.b16 %v39
    %v908 = vunpack.c.l.b16 %v40
    %v909 = vunpack.c.l.b16 %v41
    %v910 = vunpack.c.l.b16 %v42
    %v911 = vpack.c.b16 %v908, %v907
    %v912 = vpack.c.b16 %v910, %v909
    %v916 = vsel %vm206, %v901, 0
    %918 = vmatpush.bf16.msra.mxu0 0
    %919 = vmatpush.bf16.msra.mxu0 0
    %920 = vmatpush.bf16.msra.mxu0 0
    %921 = vmatpush.bf16.msra.mxu0 0
    %922 = vmatpush.bf16.msra.mxu0 0
    %923 = vmatpush.bf16.msra.mxu0 0
    %924 = vmatpush.bf16.msra.mxu0 %v912
    %925 = vmatpush.bf16.msra.mxu0 %v911
    %926 = vmatmul.bf16.gmra.mxu0 %v916
    %v927 = vpop.f32.mrf.mxu0
    %v928 = vadd.f32 %v902, %v927
    %v929 = vpop.f32.mrf.mxu0
    %v930 = vadd.f32 %v902, %v929
    %931 = vdwg.mxu0
    %v932 = vmul.f32 %v928, 0.5
    %v933 = vmul.f32 %v930, 0.5
    %v934 = vmul.f32 %v928, 0.044715
    %v935 = vmul.f32 %v930, 0.044715
    %v936 = vmul.f32 %v934, %v928
    %v937 = vmul.f32 %v935, %v930
    %v938 = vmul.f32 %v936, %v928
    %v939 = vmul.f32 %v937, %v930
    %v940 = vadd.f32 %v928, %v938
    %v941 = vadd.f32 %v930, %v939
    %v942 = vmul.f32 %v940, 0.7978846
    %v943 = vmul.f32 %v941, 0.7978846
    %v944 = vtanh.pop %v942
    %v945 = vtanh.pop %v943
    %v946 = vadd.f32 %v944, 1.0
    %v947 = vadd.f32 %v945, 1.0
    %v948 = vmul.f32 %v932, %v946
    %v949 = vmul.f32 %v933, %v947
    %v950 = vpack.c.bf16 %v949, %v948
    %v951 = vperm.slane %v29, 1
    %v960 = vunpack.c.l.b16 %v43
    %v961 = vunpack.c.l.b16 %v44
    %v962 = vunpack.c.l.b16 %v45
    %v963 = vunpack.c.l.b16 %v46
    %v964 = vunpack.c.l.b16 %v47
    %v965 = vunpack.c.l.b16 %v48
    %v966 = vunpack.c.l.b16 %v49
    %v967 = vunpack.c.l.b16 %v50
    %v968 = vpack.c.b16 %v961, %v960
    %v969 = vpack.c.b16 %v963, %v962
    %v970 = vpack.c.b16 %v965, %v964
    %v971 = vpack.c.b16 %v967, %v966
    %vm976 = vcmask 523264
    %v978 = vsel %vm976, %v950, 0
    %980 = vmatpush.bf16.msra.mxu0 0
    %981 = vmatpush.bf16.msra.mxu0 0
    %982 = vmatpush.bf16.msra.mxu0 0
    %983 = vmatpush.bf16.msra.mxu0 0
    %984 = vmatpush.bf16.msra.mxu0 %v971
    %985 = vmatpush.bf16.msra.mxu0 %v970
    %986 = vmatpush.bf16.msra.mxu0 %v969
    %987 = vmatpush.bf16.msra.mxu0 %v968
    %988 = vmatmul.bf16.gmra.mxu0 %v978
    %v989 = vpop.f32.mrf.mxu0
    %v990 = vadd.f32 %v951, %v989
    %v991 = vpop.f32.mrf.mxu0
    %v992 = vadd.f32 %v951, %v991
    %993 = vdwg.mxu0
    %v994 = vadd.f32 %v899, %v990
    %v995 = vadd.f32 %v900, %v992
    %v996 = vsel %vm206, %v994, 0.0
    %997 = vadd.xlane.f32.xlu0 %v996
    %v998 = vpop.xlane.xlu0 %997
    %v999 = vsel %vm206, %v995, 0.0
    %1000 = vadd.xlane.f32.xlu0 %v999
    %v1001 = vpop.xlane.xlu0 %1000
    %v1002 = vmul.f32 %v998, %v219
    %v1003 = vmul.f32 %v1001, %v219
    %v1004 = vsub.f32 %v994, %v1002
    %v1005 = vsub.f32 %v995, %v1003
    %v1006 = vmul.f32 %v1004, %v1004
    %v1007 = vmul.f32 %v1005, %v1005
    %v1008 = vsel %vm206, %v1006, 0.0
    %1009 = vadd.xlane.f32.xlu0 %v1008
    %v1010 = vpop.xlane.xlu0 %1009
    %v1011 = vsel %vm206, %v1007, 0.0
    %1012 = vadd.xlane.f32.xlu0 %v1011
    %v1013 = vpop.xlane.xlu0 %1012
    %v1014 = vmul.f32 %v1010, %v219
    %v1015 = vmul.f32 %v1013, %v219
    %v1016 = vadd.f32 %v1014, 1e-12
    %v1017 = vadd.f32 %v1015, 1e-12
    %v1018 = vrsqrt.pop %v1016
    %v1019 = vmul.f32 %v1018, %v1016
    %v1020 = vmul.f32 %v1019, %v1018
    %v1021 = vmul.f32 0.5, %v1020
    %v1022 = vsub.f32 1.5, %v1021
    %v1023 = vmul.f32 %v1018, %v1022
    %vm1024 = vweird.f32 %v1016
    %vm1025 = vweird.f32 %v1018
    %vm1026 = vmor %vm1024, %vm1025
    %v1027 = vsel %vm1026, %v1018, %v1023
    %v1028 = vrsqrt.pop %v1017
    %v1029 = vmul.f32 %v1028, %v1017
    %v1030 = vmul.f32 %v1029, %v1028
    %v1031 = vmul.f32 0.5, %v1030
    %v1032 = vsub.f32 1.5, %v1031
    %v1033 = vmul.f32 %v1028, %v1032
    %vm1034 = vweird.f32 %v1017
    %vm1035 = vweird.f32 %v1028
    %vm1036 = vmor %vm1034, %vm1035
    %v1037 = vsel %vm1036, %v1028, %v1033
    %v1038 = vmul.f32 %v1004, %v1027
    %v1039 = vmul.f32 %v1005, %v1037
    %v1040 = vperm.slane %v28, 7
    %v1041 = vmul.f32 %v1038, %v1040
    %v1042 = vmul.f32 %v1039, %v1040
    %v1043 = vperm.slane %v29, 0
    %v1044 = vadd.f32 %v1041, %v1043
    %v1045 = vadd.f32 %v1042, %v1043
    %v1046 = vpack.c.bf16 %v1045, %v1044
    %v1047 = vperm.slane %v29, 2
    %v1052 = vunpack.c.l.b16 %v35
    %v1053 = vunpack.c.l.b16 %v36
    %v1054 = vunpack.c.l.b16 %v37
    %v1055 = vunpack.c.l.b16 %v38
    %v1056 = vpack.c.b16 %v1053, %v1052
    %v1057 = vpack.c.b16 %v1055, %v1054
    %v1061 = vsel %vm206, %v1046, 0
    %1063 = vmatpush.bf16.msra.mxu0 0
    %1064 = vmatpush.bf16.msra.mxu0 0
    %1065 = vmatpush.bf16.msra.mxu0 0
    %1066 = vmatpush.bf16.msra.mxu0 0
    %1067 = vmatpush.bf16.msra.mxu0 0
    %1068 = vmatpush.bf16.msra.mxu0 0
    %1069 = vmatpush.bf16.msra.mxu0 %v1057
    %1070 = vmatpush.bf16.msra.mxu0 %v1056
    %1071 = vmatmul.bf16.gmra.mxu0 %v1061
    %v1072 = vpop.f32.mrf.mxu0
    %v1073 = vadd.f32 %v1047, %v1072
    %v1074 = vpop.f32.mrf.mxu0
    %v1075 = vadd.f32 %v1047, %v1074
    %1076 = vdwg.mxu0
    %1079 = vrot.lane.b32.xlu0 %v1073, 120
    %v1080 = vpop.permute.xlu0 %1079
    %1081 = vrot.lane.b32.xlu0 %v1075, 120
    %v1082 = vpop.permute.xlu0 %1081
    %1085 = vrot.lane.b32.xlu0 %v1073, 112
    %v1086 = vpop.permute.xlu0 %1085
    %1087 = vrot.lane.b32.xlu0 %v1075, 112
    %v1088 = vpop.permute.xlu0 %1087
    %1091 = vrot.lane.b32.xlu0 %v1073, 104
    %v1092 = vpop.permute.xlu0 %1091
    %1093 = vrot.lane.b32.xlu0 %v1075, 104
    %v1094 = vpop.permute.xlu0 %1093
    %v1097 = vpack.c.bf16 %v1073, %v1073
    %v1098 = vpack.c.bf16 %v1075, %v1075
    %v1099 = vpack.c.bf16 %v1080, %v1080
    %v1100 = vpack.c.bf16 %v1082, %v1082
    %v1101 = vpack.c.bf16 %v1086, %v1086
    %v1102 = vpack.c.bf16 %v1088, %v1088
    %v1103 = vpack.c.bf16 %v1092, %v1092
    %v1104 = vpack.c.bf16 %v1094, %v1094
    %v1106 = vunpack.c.l.b16 %v1097
    %v1107 = vpack.c.b16 %v1106, %v1106
    %1108 = vrot.lane.b32.xlu0 %v1107, 96
    %v1109 = vpop.permute.xlu0 %1108
    %v1111 = vsel %vm340, %v1097, 0
    %v1114 = vsel %vm340, %v1109, 0
    %1116 = vmatpush.bf16.xpose.msra.mxu0 0
    %1117 = vmatpush.bf16.xpose.msra.mxu0 0
    %1118 = vmatpush.bf16.xpose.msra.mxu0 0
    %1119 = vmatpush.bf16.xpose.msra.mxu0 0
    %1120 = vmatpush.bf16.xpose.msra.mxu0 0
    %1121 = vmatpush.bf16.xpose.msra.mxu0 0
    %1122 = vmatpush.bf16.xpose.msra.mxu0 0
    %1123 = vmatpush.bf16.xpose.msra.mxu0 %v1114
    %1124 = vmatmul.bf16.gmra.mxu0 %v1111
    %v1125 = vpop.f32.mrf.mxu0
    %v1126 = vadd.f32 %v272, %v1125
    %v1127 = vpop.f32.mrf.mxu0
    %1128 = vdwg.mxu0
    %v1130 = vunpack.c.l.b16 %v1098
    %v1131 = vpack.c.b16 %v1130, %v1130
    %1132 = vrot.lane.b32.xlu0 %v1131, 96
    %v1133 = vpop.permute.xlu0 %1132
    %v1135 = vsel %vm340, %v1098, 0
    %v1138 = vsel %vm340, %v1133, 0
    %1140 = vmatpush.bf16.xpose.msra.mxu0 0
    %1141 = vmatpush.bf16.xpose.msra.mxu0 0
    %1142 = vmatpush.bf16.xpose.msra.mxu0 0
    %1143 = vmatpush.bf16.xpose.msra.mxu0 0
    %1144 = vmatpush.bf16.xpose.msra.mxu0 0
    %1145 = vmatpush.bf16.xpose.msra.mxu0 0
    %1146 = vmatpush.bf16.xpose.msra.mxu0 0
    %1147 = vmatpush.bf16.xpose.msra.mxu0 %v1138
    %1148 = vmatmul.bf16.gmra.mxu0 %v1135
    %v1149 = vpop.f32.mrf.mxu0
    %v1150 = vadd.f32 %v273, %v1149
    %v1151 = vpop.f32.mrf.mxu0
    %1152 = vdwg.mxu0
    %v1154 = vunpack.c.l.b16 %v1099
    %v1155 = vpack.c.b16 %v1154, %v1154
    %1156 = vrot.lane.b32.xlu0 %v1155, 96
    %v1157 = vpop.permute.xlu0 %1156
    %v1159 = vsel %vm340, %v1099, 0
    %v1162 = vsel %vm340, %v1157, 0
    %1164 = vmatpush.bf16.xpose.msra.mxu0 0
    %1165 = vmatpush.bf16.xpose.msra.mxu0 0
    %1166 = vmatpush.bf16.xpose.msra.mxu0 0
    %1167 = vmatpush.bf16.xpose.msra.mxu0 0
    %1168 = vmatpush.bf16.xpose.msra.mxu0 0
    %1169 = vmatpush.bf16.xpose.msra.mxu0 0
    %1170 = vmatpush.bf16.xpose.msra.mxu0 0
    %1171 = vmatpush.bf16.xpose.msra.mxu0 %v1162
    %1172 = vmatmul.bf16.gmra.mxu0 %v1159
    %v1173 = vpop.f32.mrf.mxu0
    %v1174 = vadd.f32 %v272, %v1173
    %v1175 = vpop.f32.mrf.mxu0
    %1176 = vdwg.mxu0
    %v1178 = vunpack.c.l.b16 %v1100
    %v1179 = vpack.c.b16 %v1178, %v1178
    %1180 = vrot.lane.b32.xlu0 %v1179, 96
    %v1181 = vpop.permute.xlu0 %1180
    %v1183 = vsel %vm340, %v1100, 0
    %v1186 = vsel %vm340, %v1181, 0
    %1188 = vmatpush.bf16.xpose.msra.mxu0 0
    %1189 = vmatpush.bf16.xpose.msra.mxu0 0
    %1190 = vmatpush.bf16.xpose.msra.mxu0 0
    %1191 = vmatpush.bf16.xpose.msra.mxu0 0
    %1192 = vmatpush.bf16.xpose.msra.mxu0 0
    %1193 = vmatpush.bf16.xpose.msra.mxu0 0
    %1194 = vmatpush.bf16.xpose.msra.mxu0 0
    %1195 = vmatpush.bf16.xpose.msra.mxu0 %v1186
    %1196 = vmatmul.bf16.gmra.mxu0 %v1183
    %v1197 = vpop.f32.mrf.mxu0
    %v1198 = vadd.f32 %v273, %v1197
    %v1199 = vpop.f32.mrf.mxu0
    %1200 = vdwg.mxu0
    %v1202 = vunpack.c.l.b16 %v1101
    %v1203 = vpack.c.b16 %v1202, %v1202
    %1204 = vrot.lane.b32.xlu0 %v1203, 96
    %v1205 = vpop.permute.xlu0 %1204
    %v1207 = vsel %vm340, %v1101, 0
    %v1210 = vsel %vm340, %v1205, 0
    %1212 = vmatpush.bf16.xpose.msra.mxu0 0
    %1213 = vmatpush.bf16.xpose.msra.mxu0 0
    %1214 = vmatpush.bf16.xpose.msra.mxu0 0
    %1215 = vmatpush.bf16.xpose.msra.mxu0 0
    %1216 = vmatpush.bf16.xpose.msra.mxu0 0
    %1217 = vmatpush.bf16.xpose.msra.mxu0 0
    %1218 = vmatpush.bf16.xpose.msra.mxu0 0
    %1219 = vmatpush.bf16.xpose.msra.mxu0 %v1210
    %1220 = vmatmul.bf16.gmra.mxu0 %v1207
    %v1221 = vpop.f32.mrf.mxu0
    %v1222 = vadd.f32 %v272, %v1221
    %v1223 = vpop.f32.mrf.mxu0
    %1224 = vdwg.mxu0
    %v1226 = vunpack.c.l.b16 %v1102
    %v1227 = vpack.c.b16 %v1226, %v1226
    %1228 = vrot.lane.b32.xlu0 %v1227, 96
    %v1229 = vpop.permute.xlu0 %1228
    %v1231 = vsel %vm340, %v1102, 0
    %v1234 = vsel %vm340, %v1229, 0
    %1236 = vmatpush.bf16.xpose.msra.mxu0 0
    %1237 = vmatpush.bf16.xpose.msra.mxu0 0
    %1238 = vmatpush.bf16.xpose.msra.mxu0 0
    %1239 = vmatpush.bf16.xpose.msra.mxu0 0
    %1240 = vmatpush.bf16.xpose.msra.mxu0 0
    %1241 = vmatpush.bf16.xpose.msra.mxu0 0
    %1242 = vmatpush.bf16.xpose.msra.mxu0 0
    %1243 = vmatpush.bf16.xpose.msra.mxu0 %v1234
    %1244 = vmatmul.bf16.gmra.mxu0 %v1231
    %v1245 = vpop.f32.mrf.mxu0
    %v1246 = vadd.f32 %v273, %v1245
    %v1247 = vpop.f32.mrf.mxu0
    %1248 = vdwg.mxu0
    %v1250 = vunpack.c.l.b16 %v1103
    %v1251 = vpack.c.b16 %v1250, %v1250
    %1252 = vrot.lane.b32.xlu0 %v1251, 96
    %v1253 = vpop.permute.xlu0 %1252
    %v1255 = vsel %vm340, %v1103, 0
    %v1258 = vsel %vm340, %v1253, 0
    %1260 = vmatpush.bf16.xpose.msra.mxu0 0
    %1261 = vmatpush.bf16.xpose.msra.mxu0 0
    %1262 = vmatpush.bf16.xpose.msra.mxu0 0
    %1263 = vmatpush.bf16.xpose.msra.mxu0 0
    %1264 = vmatpush.bf16.xpose.msra.mxu0 0
    %1265 = vmatpush.bf16.xpose.msra.mxu0 0
    %1266 = vmatpush.bf16.xpose.msra.mxu0 0
    %1267 = vmatpush.bf16.xpose.msra.mxu0 %v1258
    %1268 = vmatmul.bf16.gmra.mxu0 %v1255
    %v1269 = vpop.f32.mrf.mxu0
    %v1270 = vadd.f32 %v272, %v1269
    %v1271 = vpop.f32.mrf.mxu0
    %1272 = vdwg.mxu0
    %v1274 = vunpack.c.l.b16 %v1104
    %v1275 = vpack.c.b16 %v1274, %v1274
    %1276 = vrot.lane.b32.xlu0 %v1275, 96
    %v1277 = vpop.permute.xlu0 %1276
    %v1279 = vsel %vm340, %v1104, 0
    %v1282 = vsel %vm340, %v1277, 0
    %1284 = vmatpush.bf16.xpose.msra.mxu0 0
    %1285 = vmatpush.bf16.xpose.msra.mxu0 0
    %1286 = vmatpush.bf16.xpose.msra.mxu0 0
    %1287 = vmatpush.bf16.xpose.msra.mxu0 0
    %1288 = vmatpush.bf16.xpose.msra.mxu0 0
    %1289 = vmatpush.bf16.xpose.msra.mxu0 0
    %1290 = vmatpush.bf16.xpose.msra.mxu0 0
    %1291 = vmatpush.bf16.xpose.msra.mxu0 %v1282
    %1292 = vmatmul.bf16.gmra.mxu0 %v1279
    %v1293 = vpop.f32.mrf.mxu0
    %v1294 = vadd.f32 %v273, %v1293
    %v1295 = vpop.f32.mrf.mxu0
    %1296 = vdwg.mxu0
    %v1297 = vsel %vm340, %v1126, -inf
    %1298 = vmax.xlane.f32.xlu0 %v1297
    %v1299 = vpop.xlane.xlu0 %1298
    %v1300 = vsel %vm340, %v1150, -inf
    %1301 = vmax.xlane.f32.xlu0 %v1300
    %v1302 = vpop.xlane.xlu0 %1301
    %v1303 = vsel %vm340, %v1174, -inf
    %1304 = vmax.xlane.f32.xlu0 %v1303
    %v1305 = vpop.xlane.xlu0 %1304
    %v1306 = vsel %vm340, %v1198, -inf
    %1307 = vmax.xlane.f32.xlu0 %v1306
    %v1308 = vpop.xlane.xlu0 %1307
    %v1309 = vsel %vm340, %v1222, -inf
    %1310 = vmax.xlane.f32.xlu0 %v1309
    %v1311 = vpop.xlane.xlu0 %1310
    %v1312 = vsel %vm340, %v1246, -inf
    %1313 = vmax.xlane.f32.xlu0 %v1312
    %v1314 = vpop.xlane.xlu0 %1313
    %v1315 = vsel %vm340, %v1270, -inf
    %1316 = vmax.xlane.f32.xlu0 %v1315
    %v1317 = vpop.xlane.xlu0 %1316
    %v1318 = vsel %vm340, %v1294, -inf
    %1319 = vmax.xlane.f32.xlu0 %v1318
    %v1320 = vpop.xlane.xlu0 %1319
    %v1321 = vsub.f32 %v1126, %v1299
    %v1322 = vsub.f32 %v1150, %v1302
    %v1323 = vsub.f32 %v1174, %v1305
    %v1324 = vsub.f32 %v1198, %v1308
    %v1325 = vsub.f32 %v1222, %v1311
    %v1326 = vsub.f32 %v1246, %v1314
    %v1327 = vsub.f32 %v1270, %v1317
    %v1328 = vsub.f32 %v1294, %v1320
    %v1329 = vmul.f32 %v1321, 1.442695
    %v1330 = vpow.pop %v1329
    %v1331 = vmul.f32 %v1322, 1.442695
    %v1332 = vpow.pop %v1331
    %v1333 = vmul.f32 %v1323, 1.442695
    %v1334 = vpow.pop %v1333
    %v1335 = vmul.f32 %v1324, 1.442695
    %v1336 = vpow.pop %v1335
    %v1337 = vmul.f32 %v1325, 1.442695
    %v1338 = vpow.pop %v1337
    %v1339 = vmul.f32 %v1326, 1.442695
    %v1340 = vpow.pop %v1339
    %v1341 = vmul.f32 %v1327, 1.442695
    %v1342 = vpow.pop %v1341
    %v1343 = vmul.f32 %v1328, 1.442695
    %v1344 = vpow.pop %v1343
    %v1345 = vsel %vm340, %v1330, 0.0
    %1346 = vadd.xlane.f32.xlu0 %v1345
    %v1347 = vpop.xlane.xlu0 %1346
    %v1348 = vsel %vm340, %v1332, 0.0
    %1349 = vadd.xlane.f32.xlu0 %v1348
    %v1350 = vpop.xlane.xlu0 %1349
    %v1351 = vsel %vm340, %v1334, 0.0
    %1352 = vadd.xlane.f32.xlu0 %v1351
    %v1353 = vpop.xlane.xlu0 %1352
    %v1354 = vsel %vm340, %v1336, 0.0
    %1355 = vadd.xlane.f32.xlu0 %v1354
    %v1356 = vpop.xlane.xlu0 %1355
    %v1357 = vsel %vm340, %v1338, 0.0
    %1358 = vadd.xlane.f32.xlu0 %v1357
    %v1359 = vpop.xlane.xlu0 %1358
    %v1360 = vsel %vm340, %v1340, 0.0
    %1361 = vadd.xlane.f32.xlu0 %v1360
    %v1362 = vpop.xlane.xlu0 %1361
    %v1363 = vsel %vm340, %v1342, 0.0
    %1364 = vadd.xlane.f32.xlu0 %v1363
    %v1365 = vpop.xlane.xlu0 %1364
    %v1366 = vsel %vm340, %v1344, 0.0
    %1367 = vadd.xlane.f32.xlu0 %v1366
    %v1368 = vpop.xlane.xlu0 %1367
    %v1369 = vrcp.pop %v1347
    %v1370 = vrcp.pop %v1350
    %v1371 = vrcp.pop %v1353
    %v1372 = vrcp.pop %v1356
    %v1373 = vrcp.pop %v1359
    %v1374 = vrcp.pop %v1362
    %v1375 = vrcp.pop %v1365
    %v1376 = vrcp.pop %v1368
    %v1377 = vmul.f32 %v1330, %v1369
    %v1378 = vmul.f32 %v1332, %v1370
    %v1379 = vmul.f32 %v1334, %v1371
    %v1380 = vmul.f32 %v1336, %v1372
    %v1381 = vmul.f32 %v1338, %v1373
    %v1382 = vmul.f32 %v1340, %v1374
    %v1383 = vmul.f32 %v1342, %v1375
    %v1384 = vmul.f32 %v1344, %v1376
    %v1385 = vpack.c.bf16 %v1377, %v1377
    %v1386 = vpack.c.bf16 %v1378, %v1378
    %v1387 = vpack.c.bf16 %v1379, %v1379
    %v1388 = vpack.c.bf16 %v1380, %v1380
    %v1389 = vpack.c.bf16 %v1381, %v1381
    %v1390 = vpack.c.bf16 %v1382, %v1382
    %v1391 = vpack.c.bf16 %v1383, %v1383
    %v1392 = vpack.c.bf16 %v1384, %v1384
    %1393 = vrot.lane.b32.xlu0 %v1107, 64
    %v1394 = vpop.permute.xlu0 %1393
    %v1396 = vsel %vm340, %v1385, 0
    %v1399 = vsel %vm629, %v1394, 0
    %1401 = vmatpush.bf16.msra.mxu0 0
    %1402 = vmatpush.bf16.msra.mxu0 0
    %1403 = vmatpush.bf16.msra.mxu0 0
    %1404 = vmatpush.bf16.msra.mxu0 0
    %1405 = vmatpush.bf16.msra.mxu0 0
    %1406 = vmatpush.bf16.msra.mxu0 0
    %1407 = vmatpush.bf16.msra.mxu0 0
    %1408 = vmatpush.bf16.msra.mxu0 %v1399
    %1409 = vmatmul.bf16.gmra.mxu0 %v1396
    %v1410 = vpop.f32.mrf.mxu0
    %v1411 = vadd.f32 0.0, %v1410
    %v1412 = vpop.f32.mrf.mxu0
    %1413 = vdwg.mxu0
    %1414 = vrot.lane.b32.xlu0 %v1131, 64
    %v1415 = vpop.permute.xlu0 %1414
    %v1417 = vsel %vm340, %v1386, 0
    %v1420 = vsel %vm629, %v1415, 0
    %1422 = vmatpush.bf16.msra.mxu0 0
    %1423 = vmatpush.bf16.msra.mxu0 0
    %1424 = vmatpush.bf16.msra.mxu0 0
    %1425 = vmatpush.bf16.msra.mxu0 0
    %1426 = vmatpush.bf16.msra.mxu0 0
    %1427 = vmatpush.bf16.msra.mxu0 0
    %1428 = vmatpush.bf16.msra.mxu0 0
    %1429 = vmatpush.bf16.msra.mxu0 %v1420
    %1430 = vmatmul.bf16.gmra.mxu0 %v1417
    %v1431 = vpop.f32.mrf.mxu0
    %v1432 = vadd.f32 0.0, %v1431
    %v1433 = vpop.f32.mrf.mxu0
    %1434 = vdwg.mxu0
    %1435 = vrot.lane.b32.xlu0 %v1155, 64
    %v1436 = vpop.permute.xlu0 %1435
    %v1438 = vsel %vm340, %v1387, 0
    %v1441 = vsel %vm629, %v1436, 0
    %1443 = vmatpush.bf16.msra.mxu0 0
    %1444 = vmatpush.bf16.msra.mxu0 0
    %1445 = vmatpush.bf16.msra.mxu0 0
    %1446 = vmatpush.bf16.msra.mxu0 0
    %1447 = vmatpush.bf16.msra.mxu0 0
    %1448 = vmatpush.bf16.msra.mxu0 0
    %1449 = vmatpush.bf16.msra.mxu0 0
    %1450 = vmatpush.bf16.msra.mxu0 %v1441
    %1451 = vmatmul.bf16.gmra.mxu0 %v1438
    %v1452 = vpop.f32.mrf.mxu0
    %v1453 = vadd.f32 0.0, %v1452
    %v1454 = vpop.f32.mrf.mxu0
    %1455 = vdwg.mxu0
    %1456 = vrot.lane.b32.xlu0 %v1179, 64
    %v1457 = vpop.permute.xlu0 %1456
    %v1459 = vsel %vm340, %v1388, 0
    %v1462 = vsel %vm629, %v1457, 0
    %1464 = vmatpush.bf16.msra.mxu0 0
    %1465 = vmatpush.bf16.msra.mxu0 0
    %1466 = vmatpush.bf16.msra.mxu0 0
    %1467 = vmatpush.bf16.msra.mxu0 0
    %1468 = vmatpush.bf16.msra.mxu0 0
    %1469 = vmatpush.bf16.msra.mxu0 0
    %1470 = vmatpush.bf16.msra.mxu0 0
    %1471 = vmatpush.bf16.msra.mxu0 %v1462
    %1472 = vmatmul.bf16.gmra.mxu0 %v1459
    %v1473 = vpop.f32.mrf.mxu0
    %v1474 = vadd.f32 0.0, %v1473
    %v1475 = vpop.f32.mrf.mxu0
    %1476 = vdwg.mxu0
    %1477 = vrot.lane.b32.xlu0 %v1203, 64
    %v1478 = vpop.permute.xlu0 %1477
    %v1480 = vsel %vm340, %v1389, 0
    %v1483 = vsel %vm629, %v1478, 0
    %1485 = vmatpush.bf16.msra.mxu0 0
    %1486 = vmatpush.bf16.msra.mxu0 0
    %1487 = vmatpush.bf16.msra.mxu0 0
    %1488 = vmatpush.bf16.msra.mxu0 0
    %1489 = vmatpush.bf16.msra.mxu0 0
    %1490 = vmatpush.bf16.msra.mxu0 0
    %1491 = vmatpush.bf16.msra.mxu0 0
    %1492 = vmatpush.bf16.msra.mxu0 %v1483
    %1493 = vmatmul.bf16.gmra.mxu0 %v1480
    %v1494 = vpop.f32.mrf.mxu0
    %v1495 = vadd.f32 0.0, %v1494
    %v1496 = vpop.f32.mrf.mxu0
    %1497 = vdwg.mxu0
    %1498 = vrot.lane.b32.xlu0 %v1227, 64
    %v1499 = vpop.permute.xlu0 %1498
    %v1501 = vsel %vm340, %v1390, 0
    %v1504 = vsel %vm629, %v1499, 0
    %1506 = vmatpush.bf16.msra.mxu0 0
    %1507 = vmatpush.bf16.msra.mxu0 0
    %1508 = vmatpush.bf16.msra.mxu0 0
    %1509 = vmatpush.bf16.msra.mxu0 0
    %1510 = vmatpush.bf16.msra.mxu0 0
    %1511 = vmatpush.bf16.msra.mxu0 0
    %1512 = vmatpush.bf16.msra.mxu0 0
    %1513 = vmatpush.bf16.msra.mxu0 %v1504
    %1514 = vmatmul.bf16.gmra.mxu0 %v1501
    %v1515 = vpop.f32.mrf.mxu0
    %v1516 = vadd.f32 0.0, %v1515
    %v1517 = vpop.f32.mrf.mxu0
    %1518 = vdwg.mxu0
    %1519 = vrot.lane.b32.xlu0 %v1251, 64
    %v1520 = vpop.permute.xlu0 %1519
    %v1522 = vsel %vm340, %v1391, 0
    %v1525 = vsel %vm629, %v1520, 0
    %1527 = vmatpush.bf16.msra.mxu0 0
    %1528 = vmatpush.bf16.msra.mxu0 0
    %1529 = vmatpush.bf16.msra.mxu0 0
    %1530 = vmatpush.bf16.msra.mxu0 0
    %1531 = vmatpush.bf16.msra.mxu0 0
    %1532 = vmatpush.bf16.msra.mxu0 0
    %1533 = vmatpush.bf16.msra.mxu0 0
    %1534 = vmatpush.bf16.msra.mxu0 %v1525
    %1535 = vmatmul.bf16.gmra.mxu0 %v1522
    %v1536 = vpop.f32.mrf.mxu0
    %v1537 = vadd.f32 0.0, %v1536
    %v1538 = vpop.f32.mrf.mxu0
    %1539 = vdwg.mxu0
    %1540 = vrot.lane.b32.xlu0 %v1275, 64
    %v1541 = vpop.permute.xlu0 %1540
    %v1543 = vsel %vm340, %v1392, 0
    %v1546 = vsel %vm629, %v1541, 0
    %1548 = vmatpush.bf16.msra.mxu0 0
    %1549 = vmatpush.bf16.msra.mxu0 0
    %1550 = vmatpush.bf16.msra.mxu0 0
    %1551 = vmatpush.bf16.msra.mxu0 0
    %1552 = vmatpush.bf16.msra.mxu0 0
    %1553 = vmatpush.bf16.msra.mxu0 0
    %1554 = vmatpush.bf16.msra.mxu0 0
    %1555 = vmatpush.bf16.msra.mxu0 %v1546
    %1556 = vmatmul.bf16.gmra.mxu0 %v1543
    %v1557 = vpop.f32.mrf.mxu0
    %v1558 = vadd.f32 0.0, %v1557
    %v1559 = vpop.f32.mrf.mxu0
    %1560 = vdwg.mxu0
    %1563 = vrot.lane.b32.xlu0 %v1453, 8
    %v1564 = vpop.permute.xlu0 %1563
    %1565 = vrot.lane.b32.xlu0 %v1474, 8
    %v1566 = vpop.permute.xlu0 %1565
    %1571 = vrot.lane.b32.xlu0 %v1495, 16
    %v1572 = vpop.permute.xlu0 %1571
    %1573 = vrot.lane.b32.xlu0 %v1516, 16
    %v1574 = vpop.permute.xlu0 %1573
    %1579 = vrot.lane.b32.xlu0 %v1537, 24
    %v1580 = vpop.permute.xlu0 %1579
    %1581 = vrot.lane.b32.xlu0 %v1558, 24
    %v1582 = vpop.permute.xlu0 %1581
    %v1585 = vsel %vm340, %v1411, %v1564
    %v1586 = vsel %vm340, %v1432, %v1566
    %v1587 = vsel %vm174, %v1585, %v1572
    %v1588 = vsel %vm174, %v1586, %v1574
    %v1589 = vsel %vm821, %v1587, %v1580
    %v1590 = vsel %vm821, %v1588, %v1582
    %v1591 = vpack.c.bf16 %v1590, %v1589
    %v1592 = vperm.slane %v29, 3
    %1593 = vrot.lane.b32.xlu0 %v1056, 32
    %v1594 = vpop.permute.xlu0 %1593
    %1595 = vrot.lane.b32.xlu0 %v1057, 32
    %v1596 = vpop.permute.xlu0 %1595
    %v1600 = vsel %vm206, %v1591, 0
    %1602 = vmatpush.bf16.msra.mxu0 0
    %1603 = vmatpush.bf16.msra.mxu0 0
    %1604 = vmatpush.bf16.msra.mxu0 0
    %1605 = vmatpush.bf16.msra.mxu0 0
    %1606 = vmatpush.bf16.msra.mxu0 0
    %1607 = vmatpush.bf16.msra.mxu0 0
    %1608 = vmatpush.bf16.msra.mxu0 %v1596
    %1609 = vmatpush.bf16.msra.mxu0 %v1594
    %1610 = vmatmul.bf16.gmra.mxu0 %v1600
    %v1611 = vpop.f32.mrf.mxu0
    %v1612 = vadd.f32 %v1592, %v1611
    %v1613 = vpop.f32.mrf.mxu0
    %v1614 = vadd.f32 %v1592, %v1613
    %1615 = vdwg.mxu0
    %v1616 = vadd.f32 %v1044, %v1612
    %v1617 = vadd.f32 %v1045, %v1614
    %v1618 = vsel %vm206, %v1616, 0.0
    %1619 = vadd.xlane.f32.xlu0 %v1618
    %v1620 = vpop.xlane.xlu0 %1619
    %v1621 = vsel %vm206, %v1617, 0.0
    %1622 = vadd.xlane.f32.xlu0 %v1621
    %v1623 = vpop.xlane.xlu0 %1622
    %v1624 = vmul.f32 %v1620, %v219
    %v1625 = vmul.f32 %v1623, %v219
    %v1626 = vsub.f32 %v1616, %v1624
    %v1627 = vsub.f32 %v1617, %v1625
    %v1628 = vmul.f32 %v1626, %v1626
    %v1629 = vmul.f32 %v1627, %v1627
    %v1630 = vsel %vm206, %v1628, 0.0
    %1631 = vadd.xlane.f32.xlu0 %v1630
    %v1632 = vpop.xlane.xlu0 %1631
    %v1633 = vsel %vm206, %v1629, 0.0
    %1634 = vadd.xlane.f32.xlu0 %v1633
    %v1635 = vpop.xlane.xlu0 %1634
    %v1636 = vmul.f32 %v1632, %v219
    %v1637 = vmul.f32 %v1635, %v219
    %v1638 = vadd.f32 %v1636, 1e-12
    %v1639 = vadd.f32 %v1637, 1e-12
    %v1640 = vrsqrt.pop %v1638
    %v1641 = vmul.f32 %v1640, %v1638
    %v1642 = vmul.f32 %v1641, %v1640
    %v1643 = vmul.f32 0.5, %v1642
    %v1644 = vsub.f32 1.5, %v1643
    %v1645 = vmul.f32 %v1640, %v1644
    %vm1646 = vweird.f32 %v1638
    %vm1647 = vweird.f32 %v1640
    %vm1648 = vmor %vm1646, %vm1647
    %v1649 = vsel %vm1648, %v1640, %v1645
    %v1650 = vrsqrt.pop %v1639
    %v1651 = vmul.f32 %v1650, %v1639
    %v1652 = vmul.f32 %v1651, %v1650
    %v1653 = vmul.f32 0.5, %v1652
    %v1654 = vsub.f32 1.5, %v1653
    %v1655 = vmul.f32 %v1650, %v1654
    %vm1656 = vweird.f32 %v1639
    %vm1657 = vweird.f32 %v1650
    %vm1658 = vmor %vm1656, %vm1657
    %v1659 = vsel %vm1658, %v1650, %v1655
    %v1660 = vmul.f32 %v1626, %v1649
    %v1661 = vmul.f32 %v1627, %v1659
    %v1662 = vperm.slane %v29, 4
    %v1663 = vmul.f32 %v1660, %v1662
    %v1664 = vmul.f32 %v1661, %v1662
    %v1665 = vperm.slane %v29, 5
    %v1666 = vadd.f32 %v1663, %v1665
    %v1667 = vadd.f32 %v1664, %v1665
    %v1668 = vpack.c.bf16 %v1667, %v1666
    %v1669 = vperm.slane %v29, 6
    %v1674 = vunpack.c.l.b16 %v51
    %v1675 = vunpack.c.l.b16 %v52
    %v1676 = vunpack.c.l.b16 %v53
    %v1677 = vunpack.c.l.b16 %v54
    %v1678 = vpack.c.b16 %v1675, %v1674
    %v1679 = vpack.c.b16 %v1677, %v1676
    %v1683 = vsel %vm206, %v1668, 0
    %1685 = vmatpush.bf16.msra.mxu0 0
    %1686 = vmatpush.bf16.msra.mxu0 0
    %1687 = vmatpush.bf16.msra.mxu0 0
    %1688 = vmatpush.bf16.msra.mxu0 0
    %1689 = vmatpush.bf16.msra.mxu0 0
    %1690 = vmatpush.bf16.msra.mxu0 0
    %1691 = vmatpush.bf16.msra.mxu0 %v1679
    %1692 = vmatpush.bf16.msra.mxu0 %v1678
    %1693 = vmatmul.bf16.gmra.mxu0 %v1683
    %v1694 = vpop.f32.mrf.mxu0
    %v1695 = vadd.f32 %v1669, %v1694
    %v1696 = vpop.f32.mrf.mxu0
    %v1697 = vadd.f32 %v1669, %v1696
    %1698 = vdwg.mxu0
    %v1699 = vmul.f32 %v1695, 0.5
    %v1700 = vmul.f32 %v1697, 0.5
    %v1701 = vmul.f32 %v1695, 0.044715
    %v1702 = vmul.f32 %v1697, 0.044715
    %v1703 = vmul.f32 %v1701, %v1695
    %v1704 = vmul.f32 %v1702, %v1697
    %v1705 = vmul.f32 %v1703, %v1695
    %v1706 = vmul.f32 %v1704, %v1697
    %v1707 = vadd.f32 %v1695, %v1705
    %v1708 = vadd.f32 %v1697, %v1706
    %v1709 = vmul.f32 %v1707, 0.7978846
    %v1710 = vmul.f32 %v1708, 0.7978846
    %v1711 = vtanh.pop %v1709
    %v1712 = vtanh.pop %v1710
    %v1713 = vadd.f32 %v1711, 1.0
    %v1714 = vadd.f32 %v1712, 1.0
    %v1715 = vmul.f32 %v1699, %v1713
    %v1716 = vmul.f32 %v1700, %v1714
    %v1717 = vpack.c.bf16 %v1716, %v1715
    %v1718 = vperm.slane %v30, 1
    %v1727 = vunpack.c.l.b16 %v55
    %v1728 = vunpack.c.l.b16 %v56
    %v1729 = vunpack.c.l.b16 %v57
    %v1730 = vunpack.c.l.b16 %v58
    %v1731 = vunpack.c.l.b16 %v59
    %v1732 = vunpack.c.l.b16 %v60
    %v1733 = vunpack.c.l.b16 %v61
    %v1734 = vunpack.c.l.b16 %v62
    %v1735 = vpack.c.b16 %v1728, %v1727
    %v1736 = vpack.c.b16 %v1730, %v1729
    %v1737 = vpack.c.b16 %v1732, %v1731
    %v1738 = vpack.c.b16 %v1734, %v1733
    %v1744 = vsel %vm976, %v1717, 0
    %1746 = vmatpush.bf16.msra.mxu0 0
    %1747 = vmatpush.bf16.msra.mxu0 0
    %1748 = vmatpush.bf16.msra.mxu0 0
    %1749 = vmatpush.bf16.msra.mxu0 0
    %1750 = vmatpush.bf16.msra.mxu0 %v1738
    %1751 = vmatpush.bf16.msra.mxu0 %v1737
    %1752 = vmatpush.bf16.msra.mxu0 %v1736
    %1753 = vmatpush.bf16.msra.mxu0 %v1735
    %1754 = vmatmul.bf16.gmra.mxu0 %v1744
    %v1755 = vpop.f32.mrf.mxu0
    %v1756 = vadd.f32 %v1718, %v1755
    %v1757 = vpop.f32.mrf.mxu0
    %v1758 = vadd.f32 %v1718, %v1757
    %1759 = vdwg.mxu0
    %v1760 = vadd.f32 %v1666, %v1756
    %v1761 = vadd.f32 %v1667, %v1758
    %v1762 = vsel %vm206, %v1760, 0.0
    %1763 = vadd.xlane.f32.xlu0 %v1762
    %v1764 = vpop.xlane.xlu0 %1763
    %v1765 = vsel %vm206, %v1761, 0.0
    %1766 = vadd.xlane.f32.xlu0 %v1765
    %v1767 = vpop.xlane.xlu0 %1766
    %v1768 = vmul.f32 %v1764, %v219
    %v1769 = vmul.f32 %v1767, %v219
    %v1770 = vsub.f32 %v1760, %v1768
    %v1771 = vsub.f32 %v1761, %v1769
    %v1772 = vmul.f32 %v1770, %v1770
    %v1773 = vmul.f32 %v1771, %v1771
    %v1774 = vsel %vm206, %v1772, 0.0
    %1775 = vadd.xlane.f32.xlu0 %v1774
    %v1776 = vpop.xlane.xlu0 %1775
    %v1777 = vsel %vm206, %v1773, 0.0
    %1778 = vadd.xlane.f32.xlu0 %v1777
    %v1779 = vpop.xlane.xlu0 %1778
    %v1780 = vmul.f32 %v1776, %v219
    %v1781 = vmul.f32 %v1779, %v219
    %v1782 = vadd.f32 %v1780, 1e-12
    %v1783 = vadd.f32 %v1781, 1e-12
    %v1784 = vrsqrt.pop %v1782
    %v1785 = vmul.f32 %v1784, %v1782
    %v1786 = vmul.f32 %v1785, %v1784
    %v1787 = vmul.f32 0.5, %v1786
    %v1788 = vsub.f32 1.5, %v1787
    %v1789 = vmul.f32 %v1784, %v1788
    %vm1790 = vweird.f32 %v1782
    %vm1791 = vweird.f32 %v1784
    %vm1792 = vmor %vm1790, %vm1791
    %v1793 = vsel %vm1792, %v1784, %v1789
    %v1794 = vrsqrt.pop %v1783
    %v1795 = vmul.f32 %v1794, %v1783
    %v1796 = vmul.f32 %v1795, %v1794
    %v1797 = vmul.f32 0.5, %v1796
    %v1798 = vsub.f32 1.5, %v1797
    %v1799 = vmul.f32 %v1794, %v1798
    %vm1800 = vweird.f32 %v1783
    %vm1801 = vweird.f32 %v1794
    %vm1802 = vmor %vm1800, %vm1801
    %v1803 = vsel %vm1802, %v1794, %v1799
    %v1804 = vmul.f32 %v1770, %v1793
    %v1805 = vmul.f32 %v1771, %v1803
    %v1806 = vperm.slane %v29, 7
    %v1807 = vmul.f32 %v1804, %v1806
    %v1808 = vmul.f32 %v1805, %v1806
    %v1809 = vperm.slane %v30, 0
    %v1810 = vadd.f32 %v1807, %v1809
    %v1811 = vadd.f32 %v1808, %v1809
    %v1812 = vpack.c.bf16 %v1811, %v1810
    %v1813 = vld [vmem:[%s5] sm:$0xf]
    %v1814 = vld [vmem:[%s5 + $0x4] sm:$0xf]
    %v1815 = vld [vmem:[%s5 + $0x8] sm:$0xf]
    %v1816 = vld [vmem:[%s5 + $0xc] sm:$0xf]
    %v1821 = vunpack.c.l.b16 %v1813
    %v1822 = vunpack.c.l.b16 %v1814
    %v1823 = vunpack.c.l.b16 %v1815
    %v1824 = vunpack.c.l.b16 %v1816
    %v1825 = vpack.c.b16 %v1822, %v1821
    %v1826 = vpack.c.b16 %v1824, %v1823
    %v1830 = vsel %vm206, %v1812, 0
    %1832 = vmatpush.bf16.msra.mxu0 0
    %1833 = vmatpush.bf16.msra.mxu0 0
    %1834 = vmatpush.bf16.msra.mxu0 0
    %1835 = vmatpush.bf16.msra.mxu0 0
    %1836 = vmatpush.bf16.msra.mxu0 0
    %1837 = vmatpush.bf16.msra.mxu0 0
    %1838 = vmatpush.bf16.msra.mxu0 %v1826
    %1839 = vmatpush.bf16.msra.mxu0 %v1825
    %1840 = vmatmul.bf16.gmra.mxu0 %v1830
    %v1841 = vpop.f32.mrf.mxu0
    %v1842 = vadd.f32 0.0, %v1841
    %v1843 = vpop.f32.mrf.mxu0
    %v1844 = vadd.f32 0.0, %v1843
    %1845 = vdwg.mxu0
    %v1847 = vrot.slane %v1844, 7
    %vm1849 = vcmask 1040384
    %v1850 = vsel %vm1849, %v1842, %v1847
    %v1851 = vperm.slane %v30, 2
    %v1852 = vadd.f32 %v1850, %v1851
    %v1853 = vxor.u32 %v1852, 2147483648
    %v1854 = vmul.f32 %v1853, 1.442695
    %v1855 = vpow.pop %v1854
    %v1856 = vadd.f32 %v1855, 1.0
    %v1857 = vrcp.pop %v1856
    %v1858 = vmul.f32 %v1856, %v1857
    %v1859 = vsub.f32 1.0, %v1858
    %v1860 = vmul.f32 %v1857, %v1859
    %v1861 = vadd.f32 %v1857, %v1860
    %vm1862 = vweird.f32 %v1856
    %vm1863 = vweird.f32 %v1857
    %vm1864 = vmor %vm1862, %vm1863
    %v1865 = vsel %vm1864, %v1857, %v1861
    %v1866 = vand.u32 2147483647, %v1856
    %vm1867 = vcmp.eq.f32.partialorder %v1866, 8.507059e+37
    %v1868 = vand.u32 %v1856, 2147483648
    %v1869 = vor.u32 1.1754944e-38, %v1868
    %v1870 = vsel %vm1867, %v1869, %v1865
    %v1871 = vmul.f32 1.0, %v1870
    %vm1872 = vcmask 41984
    %1873 = vst.msk [vmem:[#allocation2] sm:$0x3] %vm1872, %v1871
    // Predicated region
    $region30: #{multilabel_transformer_forward.1} parent=1 // pred_check
      _
    $region31: #{multilabel_transformer_forward.1} parent=1 // pred_check_branch
      %1875 = sbr.rel (0) target = $region33
    $region32: #{multilabel_transformer_forward.1} parent=1 // pred_region
      %1877 = vsyncadd [#allocation3], 0
      %s1879 = sshll.u32 [#allocation2], 4
      %s1880 = int_to_ptr.vmem [resolvable:$true] %s1879
      %s1881 = sshll.u32 %s7, 4
      %s1882 = int_to_ptr.hbm [resolvable:$true] %s1881
      %1884 = dma.vmem_to_hbm [thread:$0]  %s1880, 32, %s1882, [#allocation3]
    $region33: #{multilabel_transformer_forward.1} parent=1 // pred_fallthru
      _
    // Predicated region
    $region34: #{multilabel_transformer_forward.1} parent=1 // pred_check
      _
    $region35: #{multilabel_transformer_forward.1} parent=1 // pred_check_branch
      %1886 = sbr.rel (0) target = $region37
    $region36: #{multilabel_transformer_forward.1} parent=1 // pred_region
      %1888 = dma.done [#allocation3], 32
    $region37: #{multilabel_transformer_forward.1} parent=1 // pred_fallthru
      _
    %1889 = vsyncpa [#allocation3], 1

</llo_original>
